<compile_context>
chip_gen: v7x
topology: tpu7x:2x2x1
jax: 0.10.0
libtpu: 0.0.40
codegen_flags: <defaults>
</compile_context>

<pallas_src>
import numpy as np
import jax
import jax.numpy as jnp
from jax.experimental import pallas as pl
from jax.experimental.pallas import tpu as pltpu

EPS = 1e-5
HID = 512
LANE = 128
# Largest single w3 N-tile (bf16 bytes) before switching to in-kernel N-tiling.
# 8 MiB keeps a double-buffered tile far under v7x's 32 MiB default scoped VMEM
# (64 MiB physical); demo-sized projections run untiled in one grid step.
W3_TILE_BYTES = 8 << 20


def _bn_relu_fold(h, gamma, beta):
    # Train-mode BatchNorm over the batch axis, folded into one scale/shift so
    # the per-element epilogue is a single FMA + ReLU. Centered variance for
    # numerical safety; rsqrt lowers to the EUP slot.
    mu = jnp.mean(h, axis=0, keepdims=True)
    d = h - mu
    var = jnp.mean(d * d, axis=0, keepdims=True)
    scale = gamma * jax.lax.rsqrt(var + EPS)
    shift = beta - mu * scale
    return jnp.maximum(h * scale + shift, 0.0)


def gen_kernel(x_ref, w1_ref, g1_ref, be1_ref,
               w2_ref, g2_ref, be2_ref,
               w3_ref, b3_ref, out_ref, h_ref):
    # Hidden layers run once (first grid step) into a resident VMEM scratch;
    # the output projection streams one N-tile of w3/b3/out per grid step.
    # Pre-BN linear biases are omitted: BatchNorm's mean subtraction cancels
    # them exactly.
    @pl.when(pl.program_id(0) == 0)
    def _():
        h = jnp.dot(x_ref[...], w1_ref[...], preferred_element_type=jnp.float32)
        h = _bn_relu_fold(h, g1_ref[...], be1_ref[...])
        h = jnp.dot(h.astype(jnp.bfloat16), w2_ref[...],
                    preferred_element_type=jnp.float32)
        h = _bn_relu_fold(h, g2_ref[...], be2_ref[...])
        h_ref[...] = h.astype(h_ref.dtype)

    out_ref[...] = (jnp.dot(h_ref[...], w3_ref[...],
                            preferred_element_type=jnp.float32)
                    + b3_ref[...]).astype(out_ref.dtype)


def generator_forward(noise, condition, params, output_shape):
    """noise: (B, latent_dim), condition: (B, cond_dim) -> (B, *output_shape)."""
    (w1, b1, g1, be1, w2, b2, g2, be2, w3, b3) = params
    del b1, b2  # cancelled exactly by train-mode BatchNorm's mean subtraction
    B = noise.shape[0]
    in_dim = noise.shape[1] + condition.shape[1]
    out_dim = int(np.prod(output_shape))

    # The concat is ~2 KiB: do it in XLA so layer 1 is a single K-dim matmul.
    x = jnp.concatenate([noise, condition], axis=1).astype(jnp.bfloat16)

    # Pad only to a multiple of 128 (lane-dense unmasked stores).
    out_dim_p = ((out_dim + LANE - 1) // LANE) * LANE
    if out_dim_p * HID * 2 <= W3_TILE_BYTES:
        tile_n = out_dim_p                       # single grid step, w3 untiled
    else:
        tile_n = max(LANE, (W3_TILE_BYTES // (HID * 2)) // LANE * LANE)
        out_dim_p = pl.cdiv(out_dim_p, tile_n) * tile_n
    if out_dim_p != out_dim:
        w3 = jnp.pad(w3, ((0, 0), (0, out_dim_p - out_dim)))
        b3 = jnp.pad(b3, ((0, 0), (0, out_dim_p - out_dim)))
    num_tiles = out_dim_p // tile_n

    cost = pl.CostEstimate(
        flops=2 * B * (in_dim * HID + HID * HID + HID * out_dim_p),
        transcendentals=2 * HID,
        bytes_accessed=2 * (x.size + w1.size + w2.size + w3.size + B * HID)
                       + 4 * (g1.size + be1.size + g2.size + be2.size
                              + b3.size + B * out_dim_p),
    )

    const = lambda j: (0, 0)      # resident blocks (x, w1, w2, BN params)
    tiled = lambda j: (0, j)      # N-tiled blocks (w3, b3, out)

    out = pl.pallas_call(
        gen_kernel,
        out_shape=jax.ShapeDtypeStruct((B, out_dim_p), jnp.float32),
        grid_spec=pltpu.PrefetchScalarGridSpec(
            num_scalar_prefetch=0,
            grid=(num_tiles,),
            in_specs=[
                pl.BlockSpec((B, in_dim), const),
                pl.BlockSpec((in_dim, HID), const),
                pl.BlockSpec((1, HID), const),
                pl.BlockSpec((1, HID), const),
                pl.BlockSpec((HID, HID), const),
                pl.BlockSpec((1, HID), const),
                pl.BlockSpec((1, HID), const),
                pl.BlockSpec((HID, tile_n), tiled),
                pl.BlockSpec((1, tile_n), tiled),
            ],
            out_specs=pl.BlockSpec((B, tile_n), tiled),
            scratch_shapes=[pltpu.VMEM((B, HID), jnp.bfloat16)],
        ),
        # "arbitrary": the hidden-layer scratch is produced on grid step 0, so
        # the N axis must stay on one core (num_tiles == 1 at demo size anyway).
        compiler_params=pltpu.CompilerParams(
            dimension_semantics=("arbitrary",)),
        cost_estimate=cost,
    )(x, w1, g1, be1, w2, g2, be2, w3, b3)

    if out_dim_p != out_dim:
        out = out[:, :out_dim]
    return out.reshape((B,) + tuple(output_shape))


def init_params(key, latent_dim, cond_dim, output_shape):
    """Synthetic init matching the PyTorch module's shapes.

    Linear weights pre-transposed as (in, out) and stored in bf16 (MXU-native,
    halves weight DMA). b1/b2 exist (as in nn.Linear) but are only used by the
    pure-JAX reference; the kernel exploits their exact cancellation under
    train-mode BatchNorm. Biases / BN params stay f32 with shape (1, out).
    """
    input_dim = latent_dim + cond_dim
    out_dim = int(np.prod(output_shape))
    ks = jax.random.split(key, 3)

    def lin(k, din, dout):
        bound = 1.0 / np.sqrt(din)
        kw, kb = jax.random.split(k)
        w = jax.random.uniform(kw, (din, dout), jnp.float32, -bound, bound)
        b = jax.random.uniform(kb, (1, dout), jnp.float32, -bound, bound)
        return w.astype(jnp.bfloat16), b

    w1, b1 = lin(ks[0], input_dim, HID)
    w2, b2 = lin(ks[1], HID, HID)
    w3, b3 = lin(ks[2], HID, out_dim)
    # BatchNorm1d default init: gamma = 1, beta = 0
    g1 = jnp.ones((1, HID), jnp.float32)
    be1 = jnp.zeros((1, HID), jnp.float32)
    g2 = jnp.ones((1, HID), jnp.float32)
    be2 = jnp.zeros((1, HID), jnp.float32)
    return (w1, b1, g1, be1, w2, b2, g2, be2, w3, b3)


def reference_forward(noise, condition, params, output_shape):
    """Pure-JAX f32 reference of the PyTorch forward (train-mode BN, with biases)."""
    (w1, b1, g1, be1, w2, b2, g2, be2, w3, b3) = params
    f32 = lambda a: a.astype(jnp.float32)
    x = jnp.concatenate([noise, condition], axis=1)

    def bn_relu(h, g, be):
        mu = jnp.mean(h, axis=0, keepdims=True)
        var = jnp.mean((h - mu) ** 2, axis=0, keepdims=True)
        return jnp.maximum(g * (h - mu) / jnp.sqrt(var + EPS) + be, 0.0)

    h = bn_relu(x @ f32(w1) + b1, g1, be1)
    h = bn_relu(h @ f32(w2) + b2, g2, be2)
    out = h @ f32(w3) + b3
    return out.reshape((noise.shape[0],) + tuple(output_shape))


if __name__ == "__main__":
    latent_dim = 16
    cond_dim = 16
    output_shape = (3, 16, 16)        # prod = 768 -> already a multiple of 128
    B = 32                            # multiple of 16 -> bf16 sublane packing

    key = jax.random.PRNGKey(0)
    k_noise, k_cond, k_params = jax.random.split(key, 3)
    noise = jax.random.normal(k_noise, (B, latent_dim), jnp.float32)
    condition = jax.random.normal(k_cond, (B, cond_dim), jnp.float32)

    params = init_params(k_params, latent_dim, cond_dim, output_shape)

    out = generator_forward(noise, condition, params, output_shape)
    out = jax.block_until_ready(out)

    ref = reference_forward(noise, condition, params, output_shape)
    # bf16 activations into the MXU (f32 accumulation) -> looser tolerance vs f32 ref
    np.testing.assert_allclose(np.asarray(out), np.asarray(ref), rtol=5e-2, atol=5e-2)

    assert out.shape == (B,) + tuple(output_shape)
    print("KERNEL_OK")
</pallas_src>

<mosaic_0001>
module attributes {stable_mosaic.version = 11 : i64} {
  func.func @gen_kernel(%arg0: i32, %arg1: memref<32x32xbf16, #tpu.memory_space<vmem>>, %arg2: memref<32x512xbf16, #tpu.memory_space<vmem>>, %arg3: memref<1x512xf32, #tpu.memory_space<vmem>>, %arg4: memref<1x512xf32, #tpu.memory_space<vmem>>, %arg5: memref<512x512xbf16, #tpu.memory_space<vmem>>, %arg6: memref<1x512xf32, #tpu.memory_space<vmem>>, %arg7: memref<1x512xf32, #tpu.memory_space<vmem>>, %arg8: memref<512x768xbf16, #tpu.memory_space<vmem>>, %arg9: memref<1x768xf32, #tpu.memory_space<vmem>>, %arg10: memref<32x768xf32, #tpu.memory_space<vmem>>, %arg11: memref<32x512xbf16, #tpu.memory_space<vmem>>) attributes {dimension_semantics = [#tpu.dimension_semantics<arbitrary>], iteration_bounds = array<i64: 1>, scalar_prefetch = 0 : i64, scratch_operands = 1 : i64, tpu.core_type = #tpu.core_type<tc>, window_params = [{pipeline_mode = #tpu.pipeline_mode<synchronous>, transform_indices = @transform_0, window_bounds = array<i64: 32, 32>}, {pipeline_mode = #tpu.pipeline_mode<synchronous>, transform_indices = @transform_1, window_bounds = array<i64: 32, 512>}, {pipeline_mode = #tpu.pipeline_mode<synchronous>, transform_indices = @transform_2, window_bounds = array<i64: 1, 512>}, {pipeline_mode = #tpu.pipeline_mode<synchronous>, transform_indices = @transform_3, window_bounds = array<i64: 1, 512>}, {pipeline_mode = #tpu.pipeline_mode<synchronous>, transform_indices = @transform_4, window_bounds = array<i64: 512, 512>}, {pipeline_mode = #tpu.pipeline_mode<synchronous>, transform_indices = @transform_5, window_bounds = array<i64: 1, 512>}, {pipeline_mode = #tpu.pipeline_mode<synchronous>, transform_indices = @transform_6, window_bounds = array<i64: 1, 512>}, {transform_indices = @transform_7, window_bounds = array<i64: 512, 768>}, {transform_indices = @transform_8, window_bounds = array<i64: 1, 768>}, {transform_indices = @transform_9, window_bounds = array<i64: 32, 768>}]} {
    %c0_i32 = arith.constant 0 : i32
    %0 = arith.cmpi eq, %arg0, %c0_i32 : i32
    %1 = arith.extui %0 : i1 to i32
    %c0_i32_0 = arith.constant 0 : i32
    %2 = arith.cmpi ne, %1, %c0_i32_0 : i32
    scf.if %2 {
      %c0_8 = arith.constant 0 : index
      %c0_9 = arith.constant 0 : index
      %10 = vector.load %arg1[%c0_8, %c0_9] : memref<32x32xbf16, #tpu.memory_space<vmem>>, vector<32x32xbf16>
      %c0_10 = arith.constant 0 : index
      %c0_11 = arith.constant 0 : index
      %11 = vector.load %arg2[%c0_10, %c0_11] : memref<32x512xbf16, #tpu.memory_space<vmem>>, vector<32x512xbf16>
      %cst_12 = arith.constant dense<0.000000e+00> : vector<32x512xf32>
      %12 = tpu.matmul %10, %11, %cst_12 {dimension_numbers = #tpu.dot_dimension_numbers<[1], [0], [0], [1], [0, 0, 1, 1], [], []>} : vector<32x32xbf16>, vector<32x512xbf16>, vector<32x512xf32> -> vector<32x512xf32>
      %c0_13 = arith.constant 0 : index
      %c0_14 = arith.constant 0 : index
      %13 = vector.load %arg3[%c0_13, %c0_14] : memref<1x512xf32, #tpu.memory_space<vmem>>, vector<1x512xf32>
      %c0_15 = arith.constant 0 : index
      %c0_16 = arith.constant 0 : index
      %14 = vector.load %arg4[%c0_15, %c0_16] : memref<1x512xf32, #tpu.memory_space<vmem>>, vector<1x512xf32>
      %cst_17 = arith.constant dense<0.000000e+00> : vector<512xf32>
      %15 = vector.multi_reduction <add>, %12, %cst_17 [0] : vector<32x512xf32> to vector<512xf32>
      %16 = vector.shape_cast %15 : vector<512xf32> to vector<1x512xf32>
      %cst_18 = arith.constant 3.200000e+01 : f32
      %17 = vector.broadcast %cst_18 : f32 to vector<1x512xf32>
      %18 = arith.divf %16, %17 : vector<1x512xf32>
      %19 = vector.broadcast %18 : vector<1x512xf32> to vector<32x512xf32>
      %20 = arith.subf %12, %19 : vector<32x512xf32>
      %21 = arith.mulf %20, %20 : vector<32x512xf32>
      %cst_19 = arith.constant dense<0.000000e+00> : vector<512xf32>
      %22 = vector.multi_reduction <add>, %21, %cst_19 [0] : vector<32x512xf32> to vector<512xf32>
      %23 = vector.shape_cast %22 : vector<512xf32> to vector<1x512xf32>
      %cst_20 = arith.constant 3.200000e+01 : f32
      %24 = vector.broadcast %cst_20 : f32 to vector<1x512xf32>
      %25 = arith.divf %23, %24 : vector<1x512xf32>
      %cst_21 = arith.constant 9.99999974E-6 : f32
      %26 = vector.broadcast %cst_21 : f32 to vector<1x512xf32>
      %27 = arith.addf %25, %26 : vector<1x512xf32>
      %28 = math.rsqrt %27 : vector<1x512xf32>
      %29 = arith.mulf %13, %28 : vector<1x512xf32>
      %30 = arith.mulf %18, %29 : vector<1x512xf32>
      %31 = arith.subf %14, %30 : vector<1x512xf32>
      %32 = vector.broadcast %29 : vector<1x512xf32> to vector<32x512xf32>
      %33 = arith.mulf %12, %32 : vector<32x512xf32>
      %34 = vector.broadcast %31 : vector<1x512xf32> to vector<32x512xf32>
      %35 = arith.addf %33, %34 : vector<32x512xf32>
      %cst_22 = arith.constant 0.000000e+00 : f32
      %36 = vector.broadcast %cst_22 : f32 to vector<32x512xf32>
      %37 = arith.maximumf %35, %36 : vector<32x512xf32>
      %38 = arith.truncf %37 : vector<32x512xf32> to vector<32x512xbf16>
      %c0_23 = arith.constant 0 : index
      %c0_24 = arith.constant 0 : index
      %39 = vector.load %arg5[%c0_23, %c0_24] : memref<512x512xbf16, #tpu.memory_space<vmem>>, vector<512x512xbf16>
      %cst_25 = arith.constant dense<0.000000e+00> : vector<32x512xf32>
      %40 = tpu.matmul %38, %39, %cst_25 {dimension_numbers = #tpu.dot_dimension_numbers<[1], [0], [0], [1], [0, 0, 1, 1], [], []>} : vector<32x512xbf16>, vector<512x512xbf16>, vector<32x512xf32> -> vector<32x512xf32>
      %c0_26 = arith.constant 0 : index
      %c0_27 = arith.constant 0 : index
      %41 = vector.load %arg6[%c0_26, %c0_27] : memref<1x512xf32, #tpu.memory_space<vmem>>, vector<1x512xf32>
      %c0_28 = arith.constant 0 : index
      %c0_29 = arith.constant 0 : index
      %42 = vector.load %arg7[%c0_28, %c0_29] : memref<1x512xf32, #tpu.memory_space<vmem>>, vector<1x512xf32>
      %cst_30 = arith.constant dense<0.000000e+00> : vector<512xf32>
      %43 = vector.multi_reduction <add>, %40, %cst_30 [0] : vector<32x512xf32> to vector<512xf32>
      %44 = vector.shape_cast %43 : vector<512xf32> to vector<1x512xf32>
      %cst_31 = arith.constant 3.200000e+01 : f32
      %45 = vector.broadcast %cst_31 : f32 to vector<1x512xf32>
      %46 = arith.divf %44, %45 : vector<1x512xf32>
      %47 = vector.broadcast %46 : vector<1x512xf32> to vector<32x512xf32>
      %48 = arith.subf %40, %47 : vector<32x512xf32>
      %49 = arith.mulf %48, %48 : vector<32x512xf32>
      %cst_32 = arith.constant dense<0.000000e+00> : vector<512xf32>
      %50 = vector.multi_reduction <add>, %49, %cst_32 [0] : vector<32x512xf32> to vector<512xf32>
      %51 = vector.shape_cast %50 : vector<512xf32> to vector<1x512xf32>
      %cst_33 = arith.constant 3.200000e+01 : f32
      %52 = vector.broadcast %cst_33 : f32 to vector<1x512xf32>
      %53 = arith.divf %51, %52 : vector<1x512xf32>
      %cst_34 = arith.constant 9.99999974E-6 : f32
      %54 = vector.broadcast %cst_34 : f32 to vector<1x512xf32>
      %55 = arith.addf %53, %54 : vector<1x512xf32>
      %56 = math.rsqrt %55 : vector<1x512xf32>
      %57 = arith.mulf %41, %56 : vector<1x512xf32>
      %58 = arith.mulf %46, %57 : vector<1x512xf32>
      %59 = arith.subf %42, %58 : vector<1x512xf32>
      %60 = vector.broadcast %57 : vector<1x512xf32> to vector<32x512xf32>
      %61 = arith.mulf %40, %60 : vector<32x512xf32>
      %62 = vector.broadcast %59 : vector<1x512xf32> to vector<32x512xf32>
      %63 = arith.addf %61, %62 : vector<32x512xf32>
      %cst_35 = arith.constant 0.000000e+00 : f32
      %64 = vector.broadcast %cst_35 : f32 to vector<32x512xf32>
      %65 = arith.maximumf %63, %64 : vector<32x512xf32>
      %66 = arith.truncf %65 : vector<32x512xf32> to vector<32x512xbf16>
      %c0_36 = arith.constant 0 : index
      %c0_37 = arith.constant 0 : index
      %67 = vector.load %arg11[%c0_36, %c0_37] : memref<32x512xbf16, #tpu.memory_space<vmem>>, vector<32x512xbf16>
      tpu.vector_store %arg11[%c0_36, %c0_37], %66 {strides = array<i32>} : memref<32x512xbf16, #tpu.memory_space<vmem>>, vector<32x512xbf16>,
    } else {
    }
    %c0 = arith.constant 0 : index
    %c0_1 = arith.constant 0 : index
    %3 = vector.load %arg11[%c0, %c0_1] : memref<32x512xbf16, #tpu.memory_space<vmem>>, vector<32x512xbf16>
    %c0_2 = arith.constant 0 : index
    %c0_3 = arith.constant 0 : index
    %4 = vector.load %arg8[%c0_2, %c0_3] : memref<512x768xbf16, #tpu.memory_space<vmem>>, vector<512x768xbf16>
    %cst = arith.constant dense<0.000000e+00> : vector<32x768xf32>
    %5 = tpu.matmul %3, %4, %cst {dimension_numbers = #tpu.dot_dimension_numbers<[1], [0], [0], [1], [0, 0, 1, 1], [], []>} : vector<32x512xbf16>, vector<512x768xbf16>, vector<32x768xf32> -> vector<32x768xf32>
    %c0_4 = arith.constant 0 : index
    %c0_5 = arith.constant 0 : index
    %6 = vector.load %arg9[%c0_4, %c0_5] : memref<1x768xf32, #tpu.memory_space<vmem>>, vector<1x768xf32>
    %7 = vector.broadcast %6 : vector<1x768xf32> to vector<32x768xf32>
    %8 = arith.addf %5, %7 : vector<32x768xf32>
    %c0_6 = arith.constant 0 : index
    %c0_7 = arith.constant 0 : index
    %9 = vector.load %arg10[%c0_6, %c0_7] : memref<32x768xf32, #tpu.memory_space<vmem>>, vector<32x768xf32>
    tpu.vector_store %arg10[%c0_6, %c0_7], %8 {strides = array<i32>} : memref<32x768xf32, #tpu.memory_space<vmem>>, vector<32x768xf32>,
    return
  }
  func.func @transform_0(%arg0: i32) -> (i32, i32) {
    %c0_i32 = arith.constant 0 : i32
    %c0_i32_0 = arith.constant 0 : i32
    %c0_i32_1 = arith.constant 0 : i32
    return %c0_i32, %c0_i32_0 : i32, i32
  }
  func.func @transform_1(%arg0: i32) -> (i32, i32) {
    %c0_i32 = arith.constant 0 : i32
    %c0_i32_0 = arith.constant 0 : i32
    %c0_i32_1 = arith.constant 0 : i32
    return %c0_i32, %c0_i32_0 : i32, i32
  }
  func.func @transform_2(%arg0: i32) -> (i32, i32) {
    %c0_i32 = arith.constant 0 : i32
    %c0_i32_0 = arith.constant 0 : i32
    %c0_i32_1 = arith.constant 0 : i32
    return %c0_i32, %c0_i32_0 : i32, i32
  }
  func.func @transform_3(%arg0: i32) -> (i32, i32) {
    %c0_i32 = arith.constant 0 : i32
    %c0_i32_0 = arith.constant 0 : i32
    %c0_i32_1 = arith.constant 0 : i32
    return %c0_i32, %c0_i32_0 : i32, i32
  }
  func.func @transform_4(%arg0: i32) -> (i32, i32) {
    %c0_i32 = arith.constant 0 : i32
    %c0_i32_0 = arith.constant 0 : i32
    %c0_i32_1 = arith.constant 0 : i32
    return %c0_i32, %c0_i32_0 : i32, i32
  }
  func.func @transform_5(%arg0: i32) -> (i32, i32) {
    %c0_i32 = arith.constant 0 : i32
    %c0_i32_0 = arith.constant 0 : i32
    %c0_i32_1 = arith.constant 0 : i32
    return %c0_i32, %c0_i32_0 : i32, i32
  }
  func.func @transform_6(%arg0: i32) -> (i32, i32) {
    %c0_i32 = arith.constant 0 : i32
    %c0_i32_0 = arith.constant 0 : i32
    %c0_i32_1 = arith.constant 0 : i32
    return %c0_i32, %c0_i32_0 : i32, i32
  }
  func.func @transform_7(%arg0: i32) -> (i32, i32) {
    %c0_i32 = arith.constant 0 : i32
    %c0_i32_0 = arith.constant 0 : i32
    return %c0_i32, %arg0 : i32, i32
  }
  func.func @transform_8(%arg0: i32) -> (i32, i32) {
    %c0_i32 = arith.constant 0 : i32
    %c0_i32_0 = arith.constant 0 : i32
    return %c0_i32, %arg0 : i32, i32
  }
  func.func @transform_9(%arg0: i32) -> (i32, i32) {
    %c0_i32 = arith.constant 0 : i32
    %c0_i32_0 = arith.constant 0 : i32
    return %c0_i32, %arg0 : i32, i32
  }
}

</mosaic_0001>

<llo_original>
// kernel: tpu_custom_call.1
$region0: #{tpu_custom_call.1}
  #allocation0 [shape = 'u32[]', space=smem, size = 0x4, offset = 0x4, fixed_abs, tag = 'smem constant byte address 0x4 - core index']
  #allocation1 [shape = 'u32[144,128]{1,0:T(1,128)}', space=vmem, size = 0x12000, scoped, tag = 'internal scratch']
  #allocation2 [shape = 'bf16[32,512]{1,0:T(16,128)(2,1)}', space=vmem, size = 0x8000, scoped, tag = 'scratch operand']
  %s0 = inlined_call_operand.hbm [shape: bf16[32,32], index: 0, kind: input, shape index: {}]
  %s1 = inlined_call_operand.hbm [shape: bf16[32,512], index: 1, kind: input, shape index: {}]
  %s2 = inlined_call_operand.vmem [shape: f32[1,512], index: 2, kind: input, shape index: {}]
  %s3 = inlined_call_operand.hbm [shape: f32[1,512], index: 3, kind: input, shape index: {}]
  %s4 = inlined_call_operand.hbm [shape: bf16[512,512], index: 4, kind: input, shape index: {}]
  %s5 = inlined_call_operand.vmem [shape: f32[1,512], index: 5, kind: input, shape index: {}]
  %s6 = inlined_call_operand.vmem [shape: f32[1,512], index: 6, kind: input, shape index: {}]
  %s7 = inlined_call_operand.hbm [shape: bf16[512,768], index: 7, kind: input, shape index: {}]
  %s8 = inlined_call_operand.vmem [shape: f32[1,768], index: 8, kind: input, shape index: {}]
  %s9 = inlined_call_operand.hbm [shape: f32[32,768], index: 9, kind: output, shape index: {}]
  %s10 = sld [smem:[#allocation0]]
  $region70: #{tpu_custom_call.1} parent=0
    _
  %s12 = ssub.s32 1, %s10
  %s13 = scalar_select 0, %s12, %s10
  $region1: #{tpu_custom_call.1} parent=0
    #allocation3 [shape = 'u8[8192]{0}', space=vmem, size = 0x2000, scoped, tag = 'input window, operand 0, single buffered']
    #allocation4 [shape = 's32[1]{0}', space=sflag, size = 0x4, scoped, tag = 'scoped memory for tpu_custom_call.1']
    #allocation5 [shape = 's32[1]{0}', space=sflag, size = 0x4, scoped, tag = 'scoped memory for tpu_custom_call.1']
    #allocation6 [shape = 'u8[32768]{0}', space=vmem, size = 0x8000, scoped, tag = 'input window, operand 1, single buffered']
    #allocation7 [shape = 's32[1]{0}', space=sflag, size = 0x4, scoped, tag = 'scoped memory for tpu_custom_call.1']
    #allocation8 [shape = 'u8[2048]{0}', space=vmem, size = 0x800, scoped, tag = 'input window, operand 3, single buffered']
    #allocation9 [shape = 'u8[524288]{0}', space=vmem, size = 0x80000, scoped, tag = 'input window, operand 4, single buffered']
    #allocation10 [shape = 's32[1]{0}', space=sflag, size = 0x4, scoped, tag = 'scoped memory for tpu_custom_call.1']
    #allocation11 [shape = 'u8[786432]{0}', space=vmem, size = 0xc0000, scoped, tag = 'input window, operand 7, single buffered']
    #allocation12 [shape = 'u8[98304]{0}', space=vmem, size = 0x18000, scoped, tag = 'output window, operand 0, single buffered']
    %14 = vsyncpa [#allocation4], 0
    %15 = vsyncpa [#allocation7], 0
    %16 = vsyncpa [#allocation10], 0
    %17 = vsyncpa [#allocation5], 0
    // Predicated region
    $region2: #{tpu_custom_call.1} parent=1 // pred_check
      _
    $region3: #{tpu_custom_call.1} parent=1 // pred_check_branch
      %19 = sbr.rel (0) target = $region5
    $region4: #{tpu_custom_call.1} parent=1 // pred_region
      %s21 = ssub.s32 256, 256
      %22 = vsyncadd [#allocation4], %s21
      %s23 = sshll.u32 [#allocation3], 4
      %s24 = int_to_ptr.vmem [resolvable:$true] %s23
      %29 = dma.hbm_to_vmem [thread:$0]  %s0, 256, %s24, [#allocation4], 64, 64, 4
    $region5: #{tpu_custom_call.1} parent=1 // pred_fallthru
      _
    // Predicated region
    $region6: #{tpu_custom_call.1} parent=1 // pred_check
      _
    $region7: #{tpu_custom_call.1} parent=1 // pred_check_branch
      %31 = sbr.rel (0) target = $region9
    $region8: #{tpu_custom_call.1} parent=1 // pred_region
      %s33 = ssub.s32 1024, 1024
      %34 = vsyncadd [#allocation7], %s33
      %s35 = sshll.u32 [#allocation6], 4
      %s36 = int_to_ptr.vmem [resolvable:$true] %s35
      %41 = dma.hbm_to_vmem [thread:$0]  %s1, 1024, %s36, [#allocation7], 256, 256, 16
    $region9: #{tpu_custom_call.1} parent=1 // pred_fallthru
      _
    // Predicated region
    $region10: #{tpu_custom_call.1} parent=1 // pred_check
      _
    $region11: #{tpu_custom_call.1} parent=1 // pred_check_branch
      %43 = sbr.rel (0) target = $region13
    $region12: #{tpu_custom_call.1} parent=1 // pred_region
      _
    $region13: #{tpu_custom_call.1} parent=1 // pred_fallthru
      _
    // Predicated region
    $region14: #{tpu_custom_call.1} parent=1 // pred_check
      _
    $region15: #{tpu_custom_call.1} parent=1 // pred_check_branch
      %45 = sbr.rel (0) target = $region17
    $region16: #{tpu_custom_call.1} parent=1 // pred_region
      %s47 = ssub.s32 64, 64
      %48 = vsyncadd [#allocation7], %s47
      %s50 = sshll.u32 [#allocation8], 4
      %s51 = int_to_ptr.vmem [resolvable:$true] %s50
      %53 = dma.hbm_to_vmem [thread:$0]  %s3, 64, %s51, [#allocation7]
    $region17: #{tpu_custom_call.1} parent=1 // pred_fallthru
      _
    // Predicated region
    $region18: #{tpu_custom_call.1} parent=1 // pred_check
      _
    $region19: #{tpu_custom_call.1} parent=1 // pred_check_branch
      %55 = sbr.rel (0) target = $region21
    $region20: #{tpu_custom_call.1} parent=1 // pred_region
      %s57 = ssub.s32 16384, 16384
      %58 = vsyncadd [#allocation10], %s57
      %s59 = sshll.u32 [#allocation9], 4
      %s60 = int_to_ptr.vmem [resolvable:$true] %s59
      %65 = dma.hbm_to_vmem [thread:$0]  %s4, 16384, %s60, [#allocation10], 256, 256, 16
    $region21: #{tpu_custom_call.1} parent=1 // pred_fallthru
      _
    // Predicated region
    $region22: #{tpu_custom_call.1} parent=1 // pred_check
      _
    $region23: #{tpu_custom_call.1} parent=1 // pred_check_branch
      %67 = sbr.rel (0) target = $region25
    $region24: #{tpu_custom_call.1} parent=1 // pred_region
      _
    $region25: #{tpu_custom_call.1} parent=1 // pred_fallthru
      _
    // Predicated region
    $region26: #{tpu_custom_call.1} parent=1 // pred_check
      _
    $region27: #{tpu_custom_call.1} parent=1 // pred_check_branch
      %69 = sbr.rel (0) target = $region29
    $region28: #{tpu_custom_call.1} parent=1 // pred_region
      _
    $region29: #{tpu_custom_call.1} parent=1 // pred_fallthru
      _
    // Predicated region
    $region30: #{tpu_custom_call.1} parent=1 // pred_check
      _
    $region31: #{tpu_custom_call.1} parent=1 // pred_check_branch
      %71 = sbr.rel (0) target = $region33
    $region32: #{tpu_custom_call.1} parent=1 // pred_region
      %s73 = ssub.s32 24576, 24576
      %74 = vsyncadd [#allocation10], %s73
      %s75 = sshll.u32 [#allocation11], 4
      %s76 = int_to_ptr.vmem [resolvable:$true] %s75
      %81 = dma.hbm_to_vmem [thread:$0]  %s7, 24576, %s76, [#allocation10], 384, 384, 24
    $region33: #{tpu_custom_call.1} parent=1 // pred_fallthru
      _
    // Predicated region
    $region34: #{tpu_custom_call.1} parent=1 // pred_check
      _
    $region35: #{tpu_custom_call.1} parent=1 // pred_check_branch
      %83 = sbr.rel (0) target = $region37
    $region36: #{tpu_custom_call.1} parent=1 // pred_region
      _
    $region37: #{tpu_custom_call.1} parent=1 // pred_fallthru
      _
    // Predicated region
    $region38: #{tpu_custom_call.1} parent=1 // pred_check
      _
    $region39: #{tpu_custom_call.1} parent=1 // pred_check_branch
      %85 = sbr.rel (0) target = $region41
    $region40: #{tpu_custom_call.1} parent=1 // pred_region
      %86 = dma.done [#allocation4], 256
    $region41: #{tpu_custom_call.1} parent=1 // pred_fallthru
      _
    // Predicated region
    $region42: #{tpu_custom_call.1} parent=1 // pred_check
      _
    $region43: #{tpu_custom_call.1} parent=1 // pred_check_branch
      %88 = sbr.rel (0) target = $region45
    $region44: #{tpu_custom_call.1} parent=1 // pred_region
      %89 = dma.done [#allocation7], 1024
    $region45: #{tpu_custom_call.1} parent=1 // pred_fallthru
      _
    // Predicated region
    $region46: #{tpu_custom_call.1} parent=1 // pred_check
      _
    $region47: #{tpu_custom_call.1} parent=1 // pred_check_branch
      %91 = sbr.rel (0) target = $region49
    $region48: #{tpu_custom_call.1} parent=1 // pred_region
      %92 = dma.done [#allocation7], 64
    $region49: #{tpu_custom_call.1} parent=1 // pred_fallthru
      _
    // Predicated region
    $region50: #{tpu_custom_call.1} parent=1 // pred_check
      _
    $region51: #{tpu_custom_call.1} parent=1 // pred_check_branch
      %94 = sbr.rel (0) target = $region53
    $region52: #{tpu_custom_call.1} parent=1 // pred_region
      %95 = dma.done [#allocation10], 16384
    $region53: #{tpu_custom_call.1} parent=1 // pred_fallthru
      _
    // Predicated region
    $region54: #{tpu_custom_call.1} parent=1 // pred_check
      _
    $region55: #{tpu_custom_call.1} parent=1 // pred_check_branch
      %97 = sbr.rel (0) target = $region57
    $region56: #{tpu_custom_call.1} parent=1 // pred_region
      %98 = dma.done [#allocation10], 24576
    $region57: #{tpu_custom_call.1} parent=1 // pred_fallthru
      _
    %p100 = scmp.eq.s32.totalorder 0, 0
    // Predicated region
    $region58: #{tpu_custom_call.1} parent=1 // pred_check
      %p101 = pneg %p100
    $region59: #{tpu_custom_call.1} parent=1 // pred_check_branch
      %103 = sbr.rel (%p101) target = $region61
    $region60: #{tpu_custom_call.1} parent=1 // pred_region
      %v104 = vld [vmem:[#allocation3] sm:$0xf]
      %v105 = vld [vmem:[#allocation3 + $0x4] sm:$0xf]
      %v106 = vld [vmem:[#allocation3 + $0x8] sm:$0xf]
      %v107 = vld [vmem:[#allocation3 + $0xc] sm:$0xf]
      %v108 = vld [vmem:[#allocation6] sm:$0xff]
      %v109 = vld [vmem:[#allocation6 + $0x8] sm:$0xff]
      %v110 = vld [vmem:[#allocation6 + $0x10] sm:$0xff]
      %v111 = vld [vmem:[#allocation6 + $0x18] sm:$0xff]
      %v112 = vld [vmem:[#allocation6 + $0x20] sm:$0xff]
      %v113 = vld [vmem:[#allocation6 + $0x28] sm:$0xff]
      %v114 = vld [vmem:[#allocation6 + $0x30] sm:$0xff]
      %v115 = vld [vmem:[#allocation6 + $0x38] sm:$0xff]
      %v120 = vunpack.c.l.b16 %v104
      %v121 = vunpack.c.l.b16 %v105
      %v122 = vunpack.c.l.b16 %v106
      %v123 = vunpack.c.l.b16 %v107
      %v124 = vpack.c.b16 %v121, %v120
      %v125 = vpack.c.b16 %v123, %v122
      %v134 = vunpack.c.l.b16 %v108
      %v135 = vunpack.c.h.b16 %v108
      %v136 = vunpack.c.l.b16 %v109
      %v137 = vunpack.c.h.b16 %v109
      %v138 = vunpack.c.l.b16 %v110
      %v139 = vunpack.c.h.b16 %v110
      %v140 = vunpack.c.l.b16 %v111
      %v141 = vunpack.c.h.b16 %v111
      %v142 = vunpack.c.l.b16 %v112
      %v143 = vunpack.c.h.b16 %v112
      %v144 = vunpack.c.l.b16 %v113
      %v145 = vunpack.c.h.b16 %v113
      %v146 = vunpack.c.l.b16 %v114
      %v147 = vunpack.c.h.b16 %v114
      %v148 = vunpack.c.l.b16 %v115
      %v149 = vunpack.c.h.b16 %v115
      %v150 = vpack.c.b16 %v138, %v134
      %v151 = vpack.c.b16 %v139, %v135
      %v152 = vpack.c.b16 %v140, %v136
      %v153 = vpack.c.b16 %v141, %v137
      %v154 = vpack.c.b16 %v146, %v142
      %v155 = vpack.c.b16 %v147, %v143
      %v156 = vpack.c.b16 %v148, %v144
      %v157 = vpack.c.b16 %v149, %v145
      %vm166 = vcmask 261120
      %v168 = vsel %vm166, %v124, 0
      %v171 = vsel %vm166, %v125, 0
      %173 = vmatprep.subr.bf16.mxu0 %v151
      %174 = vmatpush1.bf16.msra.mxu0 %v150
      %175 = vmatprep.subr.bf16.mxu0 %v155
      %176 = vmatpush1.bf16.msra.mxu0 %v154
      %177 = vmatprep.subr.bf16.mxu0 0
      %178 = vmatpush1.bf16.msra.mxu0 0
      %179 = vmatprep.subr.bf16.mxu0 0
      %180 = vmatpush1.bf16.msra.mxu0 0
      %181 = vmatprep.subr.bf16.mxu0 0
      %182 = vmatpush1.bf16.msra.mxu0 0
      %183 = vmatprep.subr.bf16.mxu0 0
      %184 = vmatpush1.bf16.msra.mxu0 0
      %185 = vmatprep.subr.bf16.mxu0 0
      %186 = vmatpush1.bf16.msra.mxu0 0
      %187 = vmatprep.subr.bf16.mxu0 0
      %188 = vmatpush1.bf16.msra.mxu0 0
      %189 = vmatprep.subr.bf16.mxu0 0
      %190 = vmatpush1.bf16.msra.mxu0 0
      %191 = vmatprep.subr.bf16.mxu0 0
      %192 = vmatpush1.bf16.msra.mxu0 0
      %193 = vmatprep.subr.bf16.mxu0 0
      %194 = vmatpush1.bf16.msra.mxu0 0
      %195 = vmatprep.subr.bf16.mxu0 0
      %196 = vmatpush1.bf16.msra.mxu0 0
      %197 = vmatprep.subr.bf16.mxu0 0
      %198 = vmatpush1.bf16.msra.mxu0 0
      %199 = vmatprep.subr.bf16.mxu0 0
      %200 = vmatpush1.bf16.msra.mxu0 0
      %201 = vmatprep.subr.bf16.mxu0 0
      %202 = vmatpush1.bf16.msra.mxu0 0
      %203 = vmatprep.subr.bf16.mxu0 0
      %204 = vmatpush1.bf16.msra.mxu0 0
      %205 = vmatprep.mubr.bf16.mxu0 0
      %206 = vmatmul.mubr.bf16.gmra.mrb[0].mxu0 %v168
      %v207 = vpop.f32.mrb[0].mxu0
      %v208 = vadd.f32 0.0, %v207
      %v209 = vpop.f32.mrb[0].mxu0
      %v210 = vadd.f32 0.0, %v209
      %v211 = vpop.f32.mrb[0].mxu0
      %v212 = vadd.f32 0.0, %v211
      %v213 = vpop.f32.mrb[0].mxu0
      %v214 = vadd.f32 0.0, %v213
      %215 = vmatprep.mubr.bf16.mxu0 0
      %216 = vmatmul.mubr.bf16.gmra.mrb[0].mxu0 %v171
      %v217 = vpop.f32.mrb[0].mxu0
      %v218 = vadd.f32 0.0, %v217
      %v219 = vpop.f32.mrb[0].mxu0
      %v220 = vadd.f32 0.0, %v219
      %v221 = vpop.f32.mrb[0].mxu0
      %v222 = vadd.f32 0.0, %v221
      %v223 = vpop.f32.mrb[0].mxu0
      %v224 = vadd.f32 0.0, %v223
      %225 = vdwg.mxu0
      %226 = vmatprep.subr.bf16.mxu0 %v153
      %227 = vmatpush1.bf16.msra.mxu0 %v152
      %228 = vmatprep.subr.bf16.mxu0 %v157
      %229 = vmatpush1.bf16.msra.mxu0 %v156
      %230 = vmatprep.subr.bf16.mxu0 0
      %231 = vmatpush1.bf16.msra.mxu0 0
      %232 = vmatprep.subr.bf16.mxu0 0
      %233 = vmatpush1.bf16.msra.mxu0 0
      %234 = vmatprep.subr.bf16.mxu0 0
      %235 = vmatpush1.bf16.msra.mxu0 0
      %236 = vmatprep.subr.bf16.mxu0 0
      %237 = vmatpush1.bf16.msra.mxu0 0
      %238 = vmatprep.subr.bf16.mxu0 0
      %239 = vmatpush1.bf16.msra.mxu0 0
      %240 = vmatprep.subr.bf16.mxu0 0
      %241 = vmatpush1.bf16.msra.mxu0 0
      %242 = vmatprep.subr.bf16.mxu0 0
      %243 = vmatpush1.bf16.msra.mxu0 0
      %244 = vmatprep.subr.bf16.mxu0 0
      %245 = vmatpush1.bf16.msra.mxu0 0
      %246 = vmatprep.subr.bf16.mxu0 0
      %247 = vmatpush1.bf16.msra.mxu0 0
      %248 = vmatprep.subr.bf16.mxu0 0
      %249 = vmatpush1.bf16.msra.mxu0 0
      %250 = vmatprep.subr.bf16.mxu0 0
      %251 = vmatpush1.bf16.msra.mxu0 0
      %252 = vmatprep.subr.bf16.mxu0 0
      %253 = vmatpush1.bf16.msra.mxu0 0
      %254 = vmatprep.subr.bf16.mxu0 0
      %255 = vmatpush1.bf16.msra.mxu0 0
      %256 = vmatprep.subr.bf16.mxu0 0
      %257 = vmatpush1.bf16.msra.mxu0 0
      %258 = vmatprep.mubr.bf16.mxu0 0
      %259 = vmatmul.mubr.bf16.gmra.mrb[0].mxu0 %v168
      %v260 = vpop.f32.mrb[0].mxu0
      %v261 = vadd.f32 0.0, %v260
      %v262 = vpop.f32.mrb[0].mxu0
      %v263 = vadd.f32 0.0, %v262
      %v264 = vpop.f32.mrb[0].mxu0
      %v265 = vadd.f32 0.0, %v264
      %v266 = vpop.f32.mrb[0].mxu0
      %v267 = vadd.f32 0.0, %v266
      %268 = vmatprep.mubr.bf16.mxu0 0
      %269 = vmatmul.mubr.bf16.gmra.mrb[0].mxu0 %v171
      %v270 = vpop.f32.mrb[0].mxu0
      %v271 = vadd.f32 0.0, %v270
      %v272 = vpop.f32.mrb[0].mxu0
      %v273 = vadd.f32 0.0, %v272
      %v274 = vpop.f32.mrb[0].mxu0
      %v275 = vadd.f32 0.0, %v274
      %v276 = vpop.f32.mrb[0].mxu0
      %v277 = vadd.f32 0.0, %v276
      %278 = vdwg.mxu0
      %v279 = vld [vmem:[%s2] sm:$0xf]
      %v280 = vld [vmem:[#allocation8] sm:$0xf]
      %v281 = vadd.f32 %v208, %v212
      %v282 = vadd.f32 %v281, %v218
      %v283 = vadd.f32 %v282, %v222
      %v284 = vrot.slane %v283, 4
      %v285 = vadd.f32 %v283, %v284
      %v286 = vrot.slane %v285, 2
      %v287 = vadd.f32 %v285, %v286
      %v288 = vrot.slane %v287, 1
      %v289 = vadd.f32 %v287, %v288
      %v290 = vadd.f32 %v210, %v214
      %v291 = vadd.f32 %v290, %v220
      %v292 = vadd.f32 %v291, %v224
      %v293 = vrot.slane %v292, 4
      %v294 = vadd.f32 %v292, %v293
      %v295 = vrot.slane %v294, 2
      %v296 = vadd.f32 %v294, %v295
      %v297 = vrot.slane %v296, 1
      %v298 = vadd.f32 %v296, %v297
      %v299 = vadd.f32 %v261, %v265
      %v300 = vadd.f32 %v299, %v271
      %v301 = vadd.f32 %v300, %v275
      %v302 = vrot.slane %v301, 4
      %v303 = vadd.f32 %v301, %v302
      %v304 = vrot.slane %v303, 2
      %v305 = vadd.f32 %v303, %v304
      %v306 = vrot.slane %v305, 1
      %v307 = vadd.f32 %v305, %v306
      %v308 = vadd.f32 %v263, %v267
      %v309 = vadd.f32 %v308, %v273
      %v310 = vadd.f32 %v309, %v277
      %v311 = vrot.slane %v310, 4
      %v312 = vadd.f32 %v310, %v311
      %v313 = vrot.slane %v312, 2
      %v314 = vadd.f32 %v312, %v313
      %v315 = vrot.slane %v314, 1
      %v316 = vadd.f32 %v314, %v315
      %v317 = vrcp.pop 32.0
      %v318 = vmul.f32 %v289, %v317
      %v319 = vmul.f32 %v298, %v317
      %v320 = vmul.f32 %v307, %v317
      %v321 = vmul.f32 %v316, %v317
      %v322 = vsub.f32 %v208, %v318
      %v323 = vsub.f32 %v210, %v319
      %v324 = vsub.f32 %v261, %v320
      %v325 = vsub.f32 %v263, %v321
      %v326 = vsub.f32 %v212, %v318
      %v327 = vsub.f32 %v214, %v319
      %v328 = vsub.f32 %v265, %v320
      %v329 = vsub.f32 %v267, %v321
      %v330 = vsub.f32 %v218, %v318
      %v331 = vsub.f32 %v220, %v319
      %v332 = vsub.f32 %v271, %v320
      %v333 = vsub.f32 %v273, %v321
      %v334 = vsub.f32 %v222, %v318
      %v335 = vsub.f32 %v224, %v319
      %v336 = vsub.f32 %v275, %v320
      %v337 = vsub.f32 %v277, %v321
      %v338 = vmul.f32 %v322, %v322
      %v339 = vmul.f32 %v323, %v323
      %v340 = vmul.f32 %v324, %v324
      %v341 = vmul.f32 %v325, %v325
      %v342 = vmul.f32 %v326, %v326
      %v343 = vmul.f32 %v327, %v327
      %v344 = vmul.f32 %v328, %v328
      %v345 = vmul.f32 %v329, %v329
      %v346 = vmul.f32 %v330, %v330
      %v347 = vmul.f32 %v331, %v331
      %v348 = vmul.f32 %v332, %v332
      %v349 = vmul.f32 %v333, %v333
      %v350 = vmul.f32 %v334, %v334
      %v351 = vmul.f32 %v335, %v335
      %v352 = vmul.f32 %v336, %v336
      %v353 = vmul.f32 %v337, %v337
      %v354 = vadd.f32 %v338, %v342
      %v355 = vadd.f32 %v354, %v346
      %v356 = vadd.f32 %v355, %v350
      %v357 = vrot.slane %v356, 4
      %v358 = vadd.f32 %v356, %v357
      %v359 = vrot.slane %v358, 2
      %v360 = vadd.f32 %v358, %v359
      %v361 = vrot.slane %v360, 1
      %v362 = vadd.f32 %v360, %v361
      %v363 = vadd.f32 %v339, %v343
      %v364 = vadd.f32 %v363, %v347
      %v365 = vadd.f32 %v364, %v351
      %v366 = vrot.slane %v365, 4
      %v367 = vadd.f32 %v365, %v366
      %v368 = vrot.slane %v367, 2
      %v369 = vadd.f32 %v367, %v368
      %v370 = vrot.slane %v369, 1
      %v371 = vadd.f32 %v369, %v370
      %v372 = vadd.f32 %v340, %v344
      %v373 = vadd.f32 %v372, %v348
      %v374 = vadd.f32 %v373, %v352
      %v375 = vrot.slane %v374, 4
      %v376 = vadd.f32 %v374, %v375
      %v377 = vrot.slane %v376, 2
      %v378 = vadd.f32 %v376, %v377
      %v379 = vrot.slane %v378, 1
      %v380 = vadd.f32 %v378, %v379
      %v381 = vadd.f32 %v341, %v345
      %v382 = vadd.f32 %v381, %v349
      %v383 = vadd.f32 %v382, %v353
      %v384 = vrot.slane %v383, 4
      %v385 = vadd.f32 %v383, %v384
      %v386 = vrot.slane %v385, 2
      %v387 = vadd.f32 %v385, %v386
      %v388 = vrot.slane %v387, 1
      %v389 = vadd.f32 %v387, %v388
      %v390 = vmul.f32 %v362, %v317
      %v391 = vmul.f32 %v371, %v317
      %v392 = vmul.f32 %v380, %v317
      %v393 = vmul.f32 %v389, %v317
      %v394 = vadd.f32 %v390, 1e-05
      %v395 = vadd.f32 %v391, 1e-05
      %v396 = vadd.f32 %v392, 1e-05
      %v397 = vadd.f32 %v393, 1e-05
      %v398 = vrsqrt.pop %v394
      %v399 = vrsqrt.pop %v395
      %v400 = vrsqrt.pop %v396
      %v401 = vrsqrt.pop %v397
      %v406 = vcombine.low %v398, %v399
      %v407 = vcombine.low %v400, %v401
      %v409 = vunpack.c.l.s4 1966171168
      %v410 = vunpack.c.0.s8 %v409
      %v411 = vlaneseq
      %v412 = vshrl.u32 %v411, 7
      %v413 = vsub.s32 %v410, %v412
      %v414 = vrot.slane %v406, %v413
      %v416 = vunpack.c.l.s4 1966171168
      %v417 = vunpack.c.0.s8 %v416
      %v418 = vlaneseq
      %v419 = vshrl.u32 %v418, 7
      %v420 = vsub.s32 %v417, %v419
      %v421 = vrot.slane %v407, %v420
      %v422 = vcombine.low %v414, %v421
      %v424 = vunpack.c.l.s4 1966171168
      %v425 = vunpack.c.0.s8 %v424
      %v426 = vlaneseq
      %v427 = vshrl.u32 %v426, 7
      %v428 = vsub.s32 %v425, %v427
      %v429 = vrot.slane %v422, %v428
      %v431 = vmul.f32 %v279, %v429
      %v433 = vlaneseq
      %v434 = vshrl.u32 %v433, 7
      %v435 = vsub.s32 0, %v434
      %v436 = vrot.slane %v431, %v435
      %v437 = vlaneseq
      %v438 = vshrl.u32 %v437, 7
      %v439 = vsub.s32 1, %v438
      %v440 = vrot.slane %v431, %v439
      %v441 = vlaneseq
      %v442 = vshrl.u32 %v441, 7
      %v443 = vsub.s32 2, %v442
      %v444 = vrot.slane %v431, %v443
      %v445 = vlaneseq
      %v446 = vshrl.u32 %v445, 7
      %v447 = vsub.s32 3, %v446
      %v448 = vrot.slane %v431, %v447
      %v453 = vmul.f32 %v318, %v436
      %v454 = vmul.f32 %v319, %v440
      %v455 = vmul.f32 %v320, %v444
      %v456 = vmul.f32 %v321, %v448
      %v461 = vcombine.low %v453, %v454
      %v462 = vcombine.low %v455, %v456
      %v464 = vunpack.c.l.s4 1966171168
      %v465 = vunpack.c.0.s8 %v464
      %v466 = vlaneseq
      %v467 = vshrl.u32 %v466, 7
      %v468 = vsub.s32 %v465, %v467
      %v469 = vrot.slane %v461, %v468
      %v471 = vunpack.c.l.s4 1966171168
      %v472 = vunpack.c.0.s8 %v471
      %v473 = vlaneseq
      %v474 = vshrl.u32 %v473, 7
      %v475 = vsub.s32 %v472, %v474
      %v476 = vrot.slane %v462, %v475
      %v477 = vcombine.low %v469, %v476
      %v479 = vunpack.c.l.s4 1966171168
      %v480 = vunpack.c.0.s8 %v479
      %v481 = vlaneseq
      %v482 = vshrl.u32 %v481, 7
      %v483 = vsub.s32 %v480, %v482
      %v484 = vrot.slane %v477, %v483
      %v486 = vsub.f32 %v280, %v484
      %v487 = vmul.f32 %v208, %v436
      %v488 = vmul.f32 %v210, %v440
      %v489 = vmul.f32 %v261, %v444
      %v490 = vmul.f32 %v263, %v448
      %v491 = vmul.f32 %v212, %v436
      %v492 = vmul.f32 %v214, %v440
      %v493 = vmul.f32 %v265, %v444
      %v494 = vmul.f32 %v267, %v448
      %v495 = vmul.f32 %v218, %v436
      %v496 = vmul.f32 %v220, %v440
      %v497 = vmul.f32 %v271, %v444
      %v498 = vmul.f32 %v273, %v448
      %v499 = vmul.f32 %v222, %v436
      %v500 = vmul.f32 %v224, %v440
      %v501 = vmul.f32 %v275, %v444
      %v502 = vmul.f32 %v277, %v448
      %v504 = vlaneseq
      %v505 = vshrl.u32 %v504, 7
      %v506 = vsub.s32 0, %v505
      %v507 = vrot.slane %v486, %v506
      %v508 = vlaneseq
      %v509 = vshrl.u32 %v508, 7
      %v510 = vsub.s32 1, %v509
      %v511 = vrot.slane %v486, %v510
      %v512 = vlaneseq
      %v513 = vshrl.u32 %v512, 7
      %v514 = vsub.s32 2, %v513
      %v515 = vrot.slane %v486, %v514
      %v516 = vlaneseq
      %v517 = vshrl.u32 %v516, 7
      %v518 = vsub.s32 3, %v517
      %v519 = vrot.slane %v486, %v518
      %v524 = vadd.f32 %v487, %v507
      %v525 = vadd.f32 %v488, %v511
      %v526 = vadd.f32 %v489, %v515
      %v527 = vadd.f32 %v490, %v519
      %v528 = vadd.f32 %v491, %v507
      %v529 = vadd.f32 %v492, %v511
      %v530 = vadd.f32 %v493, %v515
      %v531 = vadd.f32 %v494, %v519
      %v532 = vadd.f32 %v495, %v507
      %v533 = vadd.f32 %v496, %v511
      %v534 = vadd.f32 %v497, %v515
      %v535 = vadd.f32 %v498, %v519
      %v536 = vadd.f32 %v499, %v507
      %v537 = vadd.f32 %v500, %v511
      %v538 = vadd.f32 %v501, %v515
      %v539 = vadd.f32 %v502, %v519
      %v540 = vmax.f32 %v524, 0.0
      %v541 = vmax.f32 %v525, 0.0
      %v542 = vmax.f32 %v526, 0.0
      %v543 = vmax.f32 %v527, 0.0
      %v544 = vmax.f32 %v528, 0.0
      %v545 = vmax.f32 %v529, 0.0
      %v546 = vmax.f32 %v530, 0.0
      %v547 = vmax.f32 %v531, 0.0
      %v548 = vmax.f32 %v532, 0.0
      %v549 = vmax.f32 %v533, 0.0
      %v550 = vmax.f32 %v534, 0.0
      %v551 = vmax.f32 %v535, 0.0
      %v552 = vmax.f32 %v536, 0.0
      %v553 = vmax.f32 %v537, 0.0
      %v554 = vmax.f32 %v538, 0.0
      %v555 = vmax.f32 %v539, 0.0
      %v556 = vpack.c.bf16 %v544, %v540
      %v557 = vpack.c.bf16 %v545, %v541
      %v558 = vpack.c.bf16 %v546, %v542
      %v559 = vpack.c.bf16 %v547, %v543
      %v560 = vpack.c.bf16 %v552, %v548
      %v561 = vpack.c.bf16 %v553, %v549
      %v562 = vpack.c.bf16 %v554, %v550
      %v563 = vpack.c.bf16 %v555, %v551
      %v564 = vld [vmem:[#allocation9] sm:$0xff]
      %v565 = vld [vmem:[#allocation9 + $0x8] sm:$0xff]
      %v566 = vld [vmem:[#allocation9 + $0x10] sm:$0xff]
      %v567 = vld [vmem:[#allocation9 + $0x18] sm:$0xff]
      %v568 = vld [vmem:[#allocation9 + $0x20] sm:$0xff]
      %v569 = vld [vmem:[#allocation9 + $0x28] sm:$0xff]
      %v570 = vld [vmem:[#allocation9 + $0x30] sm:$0xff]
      %v571 = vld [vmem:[#allocation9 + $0x38] sm:$0xff]
      %v572 = vld [vmem:[#allocation9 + $0x40] sm:$0xff]
      %v573 = vld [vmem:[#allocation9 + $0x48] sm:$0xff]
      %v574 = vld [vmem:[#allocation9 + $0x50] sm:$0xff]
      %v575 = vld [vmem:[#allocation9 + $0x58] sm:$0xff]
      %v576 = vld [vmem:[#allocation9 + $0x60] sm:$0xff]
      %v577 = vld [vmem:[#allocation9 + $0x68] sm:$0xff]
      %v578 = vld [vmem:[#allocation9 + $0x70] sm:$0xff]
      %v579 = vld [vmem:[#allocation9 + $0x78] sm:$0xff]
      %v580 = vld [vmem:[#allocation9 + $0x80] sm:$0xff]
      %v581 = vld [vmem:[#allocation9 + $0x88] sm:$0xff]
      %v582 = vld [vmem:[#allocation9 + $0x90] sm:$0xff]
      %v583 = vld [vmem:[#allocation9 + $0x98] sm:$0xff]
      %v584 = vld [vmem:[#allocation9 + $0xa0] sm:$0xff]
      %v585 = vld [vmem:[#allocation9 + $0xa8] sm:$0xff]
      %v586 = vld [vmem:[#allocation9 + $0xb0] sm:$0xff]
      %v587 = vld [vmem:[#allocation9 + $0xb8] sm:$0xff]
      %v588 = vld [vmem:[#allocation9 + $0xc0] sm:$0xff]
      %v589 = vld [vmem:[#allocation9 + $0xc8] sm:$0xff]
      %v590 = vld [vmem:[#allocation9 + $0xd0] sm:$0xff]
      %v591 = vld [vmem:[#allocation9 + $0xd8] sm:$0xff]
      %v592 = vld [vmem:[#allocation9 + $0xe0] sm:$0xff]
      %v593 = vld [vmem:[#allocation9 + $0xe8] sm:$0xff]
      %v594 = vld [vmem:[#allocation9 + $0xf0] sm:$0xff]
      %v595 = vld [vmem:[#allocation9 + $0xf8] sm:$0xff]
      %v596 = vld [vmem:[#allocation9 + $0x100] sm:$0xff]
      %v597 = vld [vmem:[#allocation9 + $0x108] sm:$0xff]
      %v598 = vld [vmem:[#allocation9 + $0x110] sm:$0xff]
      %v599 = vld [vmem:[#allocation9 + $0x118] sm:$0xff]
      %v600 = vld [vmem:[#allocation9 + $0x120] sm:$0xff]
      %v601 = vld [vmem:[#allocation9 + $0x128] sm:$0xff]
      %v602 = vld [vmem:[#allocation9 + $0x130] sm:$0xff]
      %v603 = vld [vmem:[#allocation9 + $0x138] sm:$0xff]
      %v604 = vld [vmem:[#allocation9 + $0x140] sm:$0xff]
      %v605 = vld [vmem:[#allocation9 + $0x148] sm:$0xff]
      %v606 = vld [vmem:[#allocation9 + $0x150] sm:$0xff]
      %v607 = vld [vmem:[#allocation9 + $0x158] sm:$0xff]
      %v608 = vld [vmem:[#allocation9 + $0x160] sm:$0xff]
      %v609 = vld [vmem:[#allocation9 + $0x168] sm:$0xff]
      %v610 = vld [vmem:[#allocation9 + $0x170] sm:$0xff]
      %v611 = vld [vmem:[#allocation9 + $0x178] sm:$0xff]
      %v612 = vld [vmem:[#allocation9 + $0x180] sm:$0xff]
      %v613 = vld [vmem:[#allocation9 + $0x188] sm:$0xff]
      %v614 = vld [vmem:[#allocation9 + $0x190] sm:$0xff]
      %v615 = vld [vmem:[#allocation9 + $0x198] sm:$0xff]
      %v616 = vld [vmem:[#allocation9 + $0x1a0] sm:$0xff]
      %v617 = vld [vmem:[#allocation9 + $0x1a8] sm:$0xff]
      %v618 = vld [vmem:[#allocation9 + $0x1b0] sm:$0xff]
      %v619 = vld [vmem:[#allocation9 + $0x1b8] sm:$0xff]
      %v620 = vld [vmem:[#allocation9 + $0x1c0] sm:$0xff]
      %v621 = vld [vmem:[#allocation9 + $0x1c8] sm:$0xff]
      %v622 = vld [vmem:[#allocation9 + $0x1d0] sm:$0xff]
      %v623 = vld [vmem:[#allocation9 + $0x1d8] sm:$0xff]
      %v624 = vld [vmem:[#allocation9 + $0x1e0] sm:$0xff]
      %v625 = vld [vmem:[#allocation9 + $0x1e8] sm:$0xff]
      %v626 = vld [vmem:[#allocation9 + $0x1f0] sm:$0xff]
      %v627 = vld [vmem:[#allocation9 + $0x1f8] sm:$0xff]
      %v628 = vld [vmem:[#allocation9 + $0x200] sm:$0xff]
      %v629 = vld [vmem:[#allocation9 + $0x208] sm:$0xff]
      %v630 = vld [vmem:[#allocation9 + $0x210] sm:$0xff]
      %v631 = vld [vmem:[#allocation9 + $0x218] sm:$0xff]
      %v632 = vld [vmem:[#allocation9 + $0x220] sm:$0xff]
      %v633 = vld [vmem:[#allocation9 + $0x228] sm:$0xff]
      %v634 = vld [vmem:[#allocation9 + $0x230] sm:$0xff]
      %v635 = vld [vmem:[#allocation9 + $0x238] sm:$0xff]
      %v636 = vld [vmem:[#allocation9 + $0x240] sm:$0xff]
      %v637 = vld [vmem:[#allocation9 + $0x248] sm:$0xff]
      %v638 = vld [vmem:[#allocation9 + $0x250] sm:$0xff]
      %v639 = vld [vmem:[#allocation9 + $0x258] sm:$0xff]
      %v640 = vld [vmem:[#allocation9 + $0x260] sm:$0xff]
      %v641 = vld [vmem:[#allocation9 + $0x268] sm:$0xff]
      %v642 = vld [vmem:[#allocation9 + $0x270] sm:$0xff]
      %v643 = vld [vmem:[#allocation9 + $0x278] sm:$0xff]
      %v644 = vld [vmem:[#allocation9 + $0x280] sm:$0xff]
      %v645 = vld [vmem:[#allocation9 + $0x288] sm:$0xff]
      %v646 = vld [vmem:[#allocation9 + $0x290] sm:$0xff]
      %v647 = vld [vmem:[#allocation9 + $0x298] sm:$0xff]
      %v648 = vld [vmem:[#allocation9 + $0x2a0] sm:$0xff]
      %v649 = vld [vmem:[#allocation9 + $0x2a8] sm:$0xff]
      %v650 = vld [vmem:[#allocation9 + $0x2b0] sm:$0xff]
      %v651 = vld [vmem:[#allocation9 + $0x2b8] sm:$0xff]
      %v652 = vld [vmem:[#allocation9 + $0x2c0] sm:$0xff]
      %v653 = vld [vmem:[#allocation9 + $0x2c8] sm:$0xff]
      %v654 = vld [vmem:[#allocation9 + $0x2d0] sm:$0xff]
      %v655 = vld [vmem:[#allocation9 + $0x2d8] sm:$0xff]
      %v656 = vld [vmem:[#allocation9 + $0x2e0] sm:$0xff]
      %v657 = vld [vmem:[#allocation9 + $0x2e8] sm:$0xff]
      %v658 = vld [vmem:[#allocation9 + $0x2f0] sm:$0xff]
      %v659 = vld [vmem:[#allocation9 + $0x2f8] sm:$0xff]
      %v660 = vld [vmem:[#allocation9 + $0x300] sm:$0xff]
      %v661 = vld [vmem:[#allocation9 + $0x308] sm:$0xff]
      %v662 = vld [vmem:[#allocation9 + $0x310] sm:$0xff]
      %v663 = vld [vmem:[#allocation9 + $0x318] sm:$0xff]
      %v664 = vld [vmem:[#allocation9 + $0x320] sm:$0xff]
      %v665 = vld [vmem:[#allocation9 + $0x328] sm:$0xff]
      %v666 = vld [vmem:[#allocation9 + $0x330] sm:$0xff]
      %v667 = vld [vmem:[#allocation9 + $0x338] sm:$0xff]
      %v668 = vld [vmem:[#allocation9 + $0x340] sm:$0xff]
      %v669 = vld [vmem:[#allocation9 + $0x348] sm:$0xff]
      %v670 = vld [vmem:[#allocation9 + $0x350] sm:$0xff]
      %v671 = vld [vmem:[#allocation9 + $0x358] sm:$0xff]
      %v672 = vld [vmem:[#allocation9 + $0x360] sm:$0xff]
      %v673 = vld [vmem:[#allocation9 + $0x368] sm:$0xff]
      %v674 = vld [vmem:[#allocation9 + $0x370] sm:$0xff]
      %v675 = vld [vmem:[#allocation9 + $0x378] sm:$0xff]
      %v676 = vld [vmem:[#allocation9 + $0x380] sm:$0xff]
      %v677 = vld [vmem:[#allocation9 + $0x388] sm:$0xff]
      %v678 = vld [vmem:[#allocation9 + $0x390] sm:$0xff]
      %v679 = vld [vmem:[#allocation9 + $0x398] sm:$0xff]
      %v680 = vld [vmem:[#allocation9 + $0x3a0] sm:$0xff]
      %v681 = vld [vmem:[#allocation9 + $0x3a8] sm:$0xff]
      %v682 = vld [vmem:[#allocation9 + $0x3b0] sm:$0xff]
      %v683 = vld [vmem:[#allocation9 + $0x3b8] sm:$0xff]
      %v684 = vld [vmem:[#allocation9 + $0x3c0] sm:$0xff]
      %v685 = vld [vmem:[#allocation9 + $0x3c8] sm:$0xff]
      %v686 = vld [vmem:[#allocation9 + $0x3d0] sm:$0xff]
      %v687 = vld [vmem:[#allocation9 + $0x3d8] sm:$0xff]
      %v688 = vld [vmem:[#allocation9 + $0x3e0] sm:$0xff]
      %v689 = vld [vmem:[#allocation9 + $0x3e8] sm:$0xff]
      %v690 = vld [vmem:[#allocation9 + $0x3f0] sm:$0xff]
      %v691 = vld [vmem:[#allocation9 + $0x3f8] sm:$0xff]
      %v820 = vunpack.c.l.b16 %v564
      %v821 = vunpack.c.h.b16 %v564
      %v822 = vunpack.c.l.b16 %v565
      %v823 = vunpack.c.h.b16 %v565
      %v824 = vunpack.c.l.b16 %v566
      %v825 = vunpack.c.h.b16 %v566
      %v826 = vunpack.c.l.b16 %v567
      %v827 = vunpack.c.h.b16 %v567
      %v828 = vunpack.c.l.b16 %v568
      %v829 = vunpack.c.h.b16 %v568
      %v830 = vunpack.c.l.b16 %v569
      %v831 = vunpack.c.h.b16 %v569
      %v832 = vunpack.c.l.b16 %v570
      %v833 = vunpack.c.h.b16 %v570
      %v834 = vunpack.c.l.b16 %v571
      %v835 = vunpack.c.h.b16 %v571
      %v836 = vunpack.c.l.b16 %v572
      %v837 = vunpack.c.h.b16 %v572
      %v838 = vunpack.c.l.b16 %v573
      %v839 = vunpack.c.h.b16 %v573
      %v840 = vunpack.c.l.b16 %v574
      %v841 = vunpack.c.h.b16 %v574
      %v842 = vunpack.c.l.b16 %v575
      %v843 = vunpack.c.h.b16 %v575
      %v844 = vunpack.c.l.b16 %v576
      %v845 = vunpack.c.h.b16 %v576
      %v846 = vunpack.c.l.b16 %v577
      %v847 = vunpack.c.h.b16 %v577
      %v848 = vunpack.c.l.b16 %v578
      %v849 = vunpack.c.h.b16 %v578
      %v850 = vunpack.c.l.b16 %v579
      %v851 = vunpack.c.h.b16 %v579
      %v852 = vunpack.c.l.b16 %v580
      %v853 = vunpack.c.h.b16 %v580
      %v854 = vunpack.c.l.b16 %v581
      %v855 = vunpack.c.h.b16 %v581
      %v856 = vunpack.c.l.b16 %v582
      %v857 = vunpack.c.h.b16 %v582
      %v858 = vunpack.c.l.b16 %v583
      %v859 = vunpack.c.h.b16 %v583
      %v860 = vunpack.c.l.b16 %v584
      %v861 = vunpack.c.h.b16 %v584
      %v862 = vunpack.c.l.b16 %v585
      %v863 = vunpack.c.h.b16 %v585
      %v864 = vunpack.c.l.b16 %v586
      %v865 = vunpack.c.h.b16 %v586
      %v866 = vunpack.c.l.b16 %v587
      %v867 = vunpack.c.h.b16 %v587
      %v868 = vunpack.c.l.b16 %v588
      %v869 = vunpack.c.h.b16 %v588
      %v870 = vunpack.c.l.b16 %v589
      %v871 = vunpack.c.h.b16 %v589
      %v872 = vunpack.c.l.b16 %v590
      %v873 = vunpack.c.h.b16 %v590
      %v874 = vunpack.c.l.b16 %v591
      %v875 = vunpack.c.h.b16 %v591
      %v876 = vunpack.c.l.b16 %v592
      %v877 = vunpack.c.h.b16 %v592
      %v878 = vunpack.c.l.b16 %v593
      %v879 = vunpack.c.h.b16 %v593
      %v880 = vunpack.c.l.b16 %v594
      %v881 = vunpack.c.h.b16 %v594
      %v882 = vunpack.c.l.b16 %v595
      %v883 = vunpack.c.h.b16 %v595
      %v884 = vunpack.c.l.b16 %v596
      %v885 = vunpack.c.h.b16 %v596
      %v886 = vunpack.c.l.b16 %v597
      %v887 = vunpack.c.h.b16 %v597
      %v888 = vunpack.c.l.b16 %v598
      %v889 = vunpack.c.h.b16 %v598
      %v890 = vunpack.c.l.b16 %v599
      %v891 = vunpack.c.h.b16 %v599
      %v892 = vunpack.c.l.b16 %v600
      %v893 = vunpack.c.h.b16 %v600
      %v894 = vunpack.c.l.b16 %v601
      %v895 = vunpack.c.h.b16 %v601
      %v896 = vunpack.c.l.b16 %v602
      %v897 = vunpack.c.h.b16 %v602
      %v898 = vunpack.c.l.b16 %v603
      %v899 = vunpack.c.h.b16 %v603
      %v900 = vunpack.c.l.b16 %v604
      %v901 = vunpack.c.h.b16 %v604
      %v902 = vunpack.c.l.b16 %v605
      %v903 = vunpack.c.h.b16 %v605
      %v904 = vunpack.c.l.b16 %v606
      %v905 = vunpack.c.h.b16 %v606
      %v906 = vunpack.c.l.b16 %v607
      %v907 = vunpack.c.h.b16 %v607
      %v908 = vunpack.c.l.b16 %v608
      %v909 = vunpack.c.h.b16 %v608
      %v910 = vunpack.c.l.b16 %v609
      %v911 = vunpack.c.h.b16 %v609
      %v912 = vunpack.c.l.b16 %v610
      %v913 = vunpack.c.h.b16 %v610
      %v914 = vunpack.c.l.b16 %v611
      %v915 = vunpack.c.h.b16 %v611
      %v916 = vunpack.c.l.b16 %v612
      %v917 = vunpack.c.h.b16 %v612
      %v918 = vunpack.c.l.b16 %v613
      %v919 = vunpack.c.h.b16 %v613
      %v920 = vunpack.c.l.b16 %v614
      %v921 = vunpack.c.h.b16 %v614
      %v922 = vunpack.c.l.b16 %v615
      %v923 = vunpack.c.h.b16 %v615
      %v924 = vunpack.c.l.b16 %v616
      %v925 = vunpack.c.h.b16 %v616
      %v926 = vunpack.c.l.b16 %v617
      %v927 = vunpack.c.h.b16 %v617
      %v928 = vunpack.c.l.b16 %v618
      %v929 = vunpack.c.h.b16 %v618
      %v930 = vunpack.c.l.b16 %v619
      %v931 = vunpack.c.h.b16 %v619
      %v932 = vunpack.c.l.b16 %v620
      %v933 = vunpack.c.h.b16 %v620
      %v934 = vunpack.c.l.b16 %v621
      %v935 = vunpack.c.h.b16 %v621
      %v936 = vunpack.c.l.b16 %v622
      %v937 = vunpack.c.h.b16 %v622
      %v938 = vunpack.c.l.b16 %v623
      %v939 = vunpack.c.h.b16 %v623
      %v940 = vunpack.c.l.b16 %v624
      %v941 = vunpack.c.h.b16 %v624
      %v942 = vunpack.c.l.b16 %v625
      %v943 = vunpack.c.h.b16 %v625
      %v944 = vunpack.c.l.b16 %v626
      %v945 = vunpack.c.h.b16 %v626
      %v946 = vunpack.c.l.b16 %v627
      %v947 = vunpack.c.h.b16 %v627
      %v948 = vunpack.c.l.b16 %v628
      %v949 = vunpack.c.h.b16 %v628
      %v950 = vunpack.c.l.b16 %v629
      %v951 = vunpack.c.h.b16 %v629
      %v952 = vunpack.c.l.b16 %v630
      %v953 = vunpack.c.h.b16 %v630
      %v954 = vunpack.c.l.b16 %v631
      %v955 = vunpack.c.h.b16 %v631
      %v956 = vunpack.c.l.b16 %v632
      %v957 = vunpack.c.h.b16 %v632
      %v958 = vunpack.c.l.b16 %v633
      %v959 = vunpack.c.h.b16 %v633
      %v960 = vunpack.c.l.b16 %v634
      %v961 = vunpack.c.h.b16 %v634
      %v962 = vunpack.c.l.b16 %v635
      %v963 = vunpack.c.h.b16 %v635
      %v964 = vunpack.c.l.b16 %v636
      %v965 = vunpack.c.h.b16 %v636
      %v966 = vunpack.c.l.b16 %v637
      %v967 = vunpack.c.h.b16 %v637
      %v968 = vunpack.c.l.b16 %v638
      %v969 = vunpack.c.h.b16 %v638
      %v970 = vunpack.c.l.b16 %v639
      %v971 = vunpack.c.h.b16 %v639
      %v972 = vunpack.c.l.b16 %v640
      %v973 = vunpack.c.h.b16 %v640
      %v974 = vunpack.c.l.b16 %v641
      %v975 = vunpack.c.h.b16 %v641
      %v976 = vunpack.c.l.b16 %v642
      %v977 = vunpack.c.h.b16 %v642
      %v978 = vunpack.c.l.b16 %v643
      %v979 = vunpack.c.h.b16 %v643
      %v980 = vunpack.c.l.b16 %v644
      %v981 = vunpack.c.h.b16 %v644
      %v982 = vunpack.c.l.b16 %v645
      %v983 = vunpack.c.h.b16 %v645
      %v984 = vunpack.c.l.b16 %v646
      %v985 = vunpack.c.h.b16 %v646
      %v986 = vunpack.c.l.b16 %v647
      %v987 = vunpack.c.h.b16 %v647
      %v988 = vunpack.c.l.b16 %v648
      %v989 = vunpack.c.h.b16 %v648
      %v990 = vunpack.c.l.b16 %v649
      %v991 = vunpack.c.h.b16 %v649
      %v992 = vunpack.c.l.b16 %v650
      %v993 = vunpack.c.h.b16 %v650
      %v994 = vunpack.c.l.b16 %v651
      %v995 = vunpack.c.h.b16 %v651
      %v996 = vunpack.c.l.b16 %v652
      %v997 = vunpack.c.h.b16 %v652
      %v998 = vunpack.c.l.b16 %v653
      %v999 = vunpack.c.h.b16 %v653
      %v1000 = vunpack.c.l.b16 %v654
      %v1001 = vunpack.c.h.b16 %v654
      %v1002 = vunpack.c.l.b16 %v655
      %v1003 = vunpack.c.h.b16 %v655
      %v1004 = vunpack.c.l.b16 %v656
      %v1005 = vunpack.c.h.b16 %v656
      %v1006 = vunpack.c.l.b16 %v657
      %v1007 = vunpack.c.h.b16 %v657
      %v1008 = vunpack.c.l.b16 %v658
      %v1009 = vunpack.c.h.b16 %v658
      %v1010 = vunpack.c.l.b16 %v659
      %v1011 = vunpack.c.h.b16 %v659
      %v1012 = vunpack.c.l.b16 %v660
      %v1013 = vunpack.c.h.b16 %v660
      %v1014 = vunpack.c.l.b16 %v661
      %v1015 = vunpack.c.h.b16 %v661
      %v1016 = vunpack.c.l.b16 %v662
      %v1017 = vunpack.c.h.b16 %v662
      %v1018 = vunpack.c.l.b16 %v663
      %v1019 = vunpack.c.h.b16 %v663
      %v1020 = vunpack.c.l.b16 %v664
      %v1021 = vunpack.c.h.b16 %v664
      %v1022 = vunpack.c.l.b16 %v665
      %v1023 = vunpack.c.h.b16 %v665
      %v1024 = vunpack.c.l.b16 %v666
      %v1025 = vunpack.c.h.b16 %v666
      %v1026 = vunpack.c.l.b16 %v667
      %v1027 = vunpack.c.h.b16 %v667
      %v1028 = vunpack.c.l.b16 %v668
      %v1029 = vunpack.c.h.b16 %v668
      %v1030 = vunpack.c.l.b16 %v669
      %v1031 = vunpack.c.h.b16 %v669
      %v1032 = vunpack.c.l.b16 %v670
      %v1033 = vunpack.c.h.b16 %v670
      %v1034 = vunpack.c.l.b16 %v671
      %v1035 = vunpack.c.h.b16 %v671
      %v1036 = vunpack.c.l.b16 %v672
      %v1037 = vunpack.c.h.b16 %v672
      %v1038 = vunpack.c.l.b16 %v673
      %v1039 = vunpack.c.h.b16 %v673
      %v1040 = vunpack.c.l.b16 %v674
      %v1041 = vunpack.c.h.b16 %v674
      %v1042 = vunpack.c.l.b16 %v675
      %v1043 = vunpack.c.h.b16 %v675
      %v1044 = vunpack.c.l.b16 %v676
      %v1045 = vunpack.c.h.b16 %v676
      %v1046 = vunpack.c.l.b16 %v677
      %v1047 = vunpack.c.h.b16 %v677
      %v1048 = vunpack.c.l.b16 %v678
      %v1049 = vunpack.c.h.b16 %v678
      %v1050 = vunpack.c.l.b16 %v679
      %v1051 = vunpack.c.h.b16 %v679
      %v1052 = vunpack.c.l.b16 %v680
      %v1053 = vunpack.c.h.b16 %v680
      %v1054 = vunpack.c.l.b16 %v681
      %v1055 = vunpack.c.h.b16 %v681
      %v1056 = vunpack.c.l.b16 %v682
      %v1057 = vunpack.c.h.b16 %v682
      %v1058 = vunpack.c.l.b16 %v683
      %v1059 = vunpack.c.h.b16 %v683
      %v1060 = vunpack.c.l.b16 %v684
      %v1061 = vunpack.c.h.b16 %v684
      %v1062 = vunpack.c.l.b16 %v685
      %v1063 = vunpack.c.h.b16 %v685
      %v1064 = vunpack.c.l.b16 %v686
      %v1065 = vunpack.c.h.b16 %v686
      %v1066 = vunpack.c.l.b16 %v687
      %v1067 = vunpack.c.h.b16 %v687
      %v1068 = vunpack.c.l.b16 %v688
      %v1069 = vunpack.c.h.b16 %v688
      %v1070 = vunpack.c.l.b16 %v689
      %v1071 = vunpack.c.h.b16 %v689
      %v1072 = vunpack.c.l.b16 %v690
      %v1073 = vunpack.c.h.b16 %v690
      %v1074 = vunpack.c.l.b16 %v691
      %v1075 = vunpack.c.h.b16 %v691
      %v1076 = vpack.c.b16 %v824, %v820
      %v1077 = vpack.c.b16 %v825, %v821
      %v1078 = vpack.c.b16 %v826, %v822
      %v1079 = vpack.c.b16 %v827, %v823
      %v1080 = vpack.c.b16 %v832, %v828
      %v1081 = vpack.c.b16 %v833, %v829
      %v1082 = vpack.c.b16 %v834, %v830
      %v1083 = vpack.c.b16 %v835, %v831
      %v1084 = vpack.c.b16 %v840, %v836
      %v1085 = vpack.c.b16 %v841, %v837
      %v1086 = vpack.c.b16 %v842, %v838
      %v1087 = vpack.c.b16 %v843, %v839
      %v1088 = vpack.c.b16 %v848, %v844
      %v1089 = vpack.c.b16 %v849, %v845
      %v1090 = vpack.c.b16 %v850, %v846
      %v1091 = vpack.c.b16 %v851, %v847
      %v1092 = vpack.c.b16 %v856, %v852
      %v1093 = vpack.c.b16 %v857, %v853
      %v1094 = vpack.c.b16 %v858, %v854
      %v1095 = vpack.c.b16 %v859, %v855
      %v1096 = vpack.c.b16 %v864, %v860
      %v1097 = vpack.c.b16 %v865, %v861
      %v1098 = vpack.c.b16 %v866, %v862
      %v1099 = vpack.c.b16 %v867, %v863
      %v1100 = vpack.c.b16 %v872, %v868
      %v1101 = vpack.c.b16 %v873, %v869
      %v1102 = vpack.c.b16 %v874, %v870
      %v1103 = vpack.c.b16 %v875, %v871
      %v1104 = vpack.c.b16 %v880, %v876
      %v1105 = vpack.c.b16 %v881, %v877
      %v1106 = vpack.c.b16 %v882, %v878
      %v1107 = vpack.c.b16 %v883, %v879
      %v1108 = vpack.c.b16 %v888, %v884
      %v1109 = vpack.c.b16 %v889, %v885
      %v1110 = vpack.c.b16 %v890, %v886
      %v1111 = vpack.c.b16 %v891, %v887
      %v1112 = vpack.c.b16 %v896, %v892
      %v1113 = vpack.c.b16 %v897, %v893
      %v1114 = vpack.c.b16 %v898, %v894
      %v1115 = vpack.c.b16 %v899, %v895
      %v1116 = vpack.c.b16 %v904, %v900
      %v1117 = vpack.c.b16 %v905, %v901
      %v1118 = vpack.c.b16 %v906, %v902
      %v1119 = vpack.c.b16 %v907, %v903
      %v1120 = vpack.c.b16 %v912, %v908
      %v1121 = vpack.c.b16 %v913, %v909
      %v1122 = vpack.c.b16 %v914, %v910
      %v1123 = vpack.c.b16 %v915, %v911
      %v1124 = vpack.c.b16 %v920, %v916
      %v1125 = vpack.c.b16 %v921, %v917
      %v1126 = vpack.c.b16 %v922, %v918
      %v1127 = vpack.c.b16 %v923, %v919
      %v1128 = vpack.c.b16 %v928, %v924
      %v1129 = vpack.c.b16 %v929, %v925
      %v1130 = vpack.c.b16 %v930, %v926
      %v1131 = vpack.c.b16 %v931, %v927
      %v1132 = vpack.c.b16 %v936, %v932
      %v1133 = vpack.c.b16 %v937, %v933
      %v1134 = vpack.c.b16 %v938, %v934
      %v1135 = vpack.c.b16 %v939, %v935
      %v1136 = vpack.c.b16 %v944, %v940
      %v1137 = vpack.c.b16 %v945, %v941
      %v1138 = vpack.c.b16 %v946, %v942
      %v1139 = vpack.c.b16 %v947, %v943
      %v1140 = vpack.c.b16 %v952, %v948
      %v1141 = vpack.c.b16 %v953, %v949
      %v1142 = vpack.c.b16 %v954, %v950
      %v1143 = vpack.c.b16 %v955, %v951
      %v1144 = vpack.c.b16 %v960, %v956
      %v1145 = vpack.c.b16 %v961, %v957
      %v1146 = vpack.c.b16 %v962, %v958
      %v1147 = vpack.c.b16 %v963, %v959
      %v1148 = vpack.c.b16 %v968, %v964
      %v1149 = vpack.c.b16 %v969, %v965
      %v1150 = vpack.c.b16 %v970, %v966
      %v1151 = vpack.c.b16 %v971, %v967
      %v1152 = vpack.c.b16 %v976, %v972
      %v1153 = vpack.c.b16 %v977, %v973
      %v1154 = vpack.c.b16 %v978, %v974
      %v1155 = vpack.c.b16 %v979, %v975
      %v1156 = vpack.c.b16 %v984, %v980
      %v1157 = vpack.c.b16 %v985, %v981
      %v1158 = vpack.c.b16 %v986, %v982
      %v1159 = vpack.c.b16 %v987, %v983
      %v1160 = vpack.c.b16 %v992, %v988
      %v1161 = vpack.c.b16 %v993, %v989
      %v1162 = vpack.c.b16 %v994, %v990
      %v1163 = vpack.c.b16 %v995, %v991
      %v1164 = vpack.c.b16 %v1000, %v996
      %v1165 = vpack.c.b16 %v1001, %v997
      %v1166 = vpack.c.b16 %v1002, %v998
      %v1167 = vpack.c.b16 %v1003, %v999
      %v1168 = vpack.c.b16 %v1008, %v1004
      %v1169 = vpack.c.b16 %v1009, %v1005
      %v1170 = vpack.c.b16 %v1010, %v1006
      %v1171 = vpack.c.b16 %v1011, %v1007
      %v1172 = vpack.c.b16 %v1016, %v1012
      %v1173 = vpack.c.b16 %v1017, %v1013
      %v1174 = vpack.c.b16 %v1018, %v1014
      %v1175 = vpack.c.b16 %v1019, %v1015
      %v1176 = vpack.c.b16 %v1024, %v1020
      %v1177 = vpack.c.b16 %v1025, %v1021
      %v1178 = vpack.c.b16 %v1026, %v1022
      %v1179 = vpack.c.b16 %v1027, %v1023
      %v1180 = vpack.c.b16 %v1032, %v1028
      %v1181 = vpack.c.b16 %v1033, %v1029
      %v1182 = vpack.c.b16 %v1034, %v1030
      %v1183 = vpack.c.b16 %v1035, %v1031
      %v1184 = vpack.c.b16 %v1040, %v1036
      %v1185 = vpack.c.b16 %v1041, %v1037
      %v1186 = vpack.c.b16 %v1042, %v1038
      %v1187 = vpack.c.b16 %v1043, %v1039
      %v1188 = vpack.c.b16 %v1048, %v1044
      %v1189 = vpack.c.b16 %v1049, %v1045
      %v1190 = vpack.c.b16 %v1050, %v1046
      %v1191 = vpack.c.b16 %v1051, %v1047
      %v1192 = vpack.c.b16 %v1056, %v1052
      %v1193 = vpack.c.b16 %v1057, %v1053
      %v1194 = vpack.c.b16 %v1058, %v1054
      %v1195 = vpack.c.b16 %v1059, %v1055
      %v1196 = vpack.c.b16 %v1064, %v1060
      %v1197 = vpack.c.b16 %v1065, %v1061
      %v1198 = vpack.c.b16 %v1066, %v1062
      %v1199 = vpack.c.b16 %v1067, %v1063
      %v1200 = vpack.c.b16 %v1072, %v1068
      %v1201 = vpack.c.b16 %v1073, %v1069
      %v1202 = vpack.c.b16 %v1074, %v1070
      %v1203 = vpack.c.b16 %v1075, %v1071
      %1332 = vmatprep.subr.bf16.mxu0 %v1077
      %1333 = vmatpush1.bf16.msra.mxu0 %v1076
      %1334 = vmatprep.subr.bf16.mxu0 %v1081
      %1335 = vmatpush1.bf16.msra.mxu0 %v1080
      %1336 = vmatprep.subr.bf16.mxu0 %v1085
      %1337 = vmatpush1.bf16.msra.mxu0 %v1084
      %1338 = vmatprep.subr.bf16.mxu0 %v1089
      %1339 = vmatpush1.bf16.msra.mxu0 %v1088
      %1340 = vmatprep.subr.bf16.mxu0 %v1093
      %1341 = vmatpush1.bf16.msra.mxu0 %v1092
      %1342 = vmatprep.subr.bf16.mxu0 %v1097
      %1343 = vmatpush1.bf16.msra.mxu0 %v1096
      %1344 = vmatprep.subr.bf16.mxu0 %v1101
      %1345 = vmatpush1.bf16.msra.mxu0 %v1100
      %1346 = vmatprep.subr.bf16.mxu0 %v1105
      %1347 = vmatpush1.bf16.msra.mxu0 %v1104
      %1348 = vmatprep.subr.bf16.mxu0 %v1109
      %1349 = vmatpush1.bf16.msra.mxu0 %v1108
      %1350 = vmatprep.subr.bf16.mxu0 %v1113
      %1351 = vmatpush1.bf16.msra.mxu0 %v1112
      %1352 = vmatprep.subr.bf16.mxu0 %v1117
      %1353 = vmatpush1.bf16.msra.mxu0 %v1116
      %1354 = vmatprep.subr.bf16.mxu0 %v1121
      %1355 = vmatpush1.bf16.msra.mxu0 %v1120
      %1356 = vmatprep.subr.bf16.mxu0 %v1125
      %1357 = vmatpush1.bf16.msra.mxu0 %v1124
      %1358 = vmatprep.subr.bf16.mxu0 %v1129
      %1359 = vmatpush1.bf16.msra.mxu0 %v1128
      %1360 = vmatprep.subr.bf16.mxu0 %v1133
      %1361 = vmatpush1.bf16.msra.mxu0 %v1132
      %1362 = vmatprep.subr.bf16.mxu0 %v1137
      %1363 = vmatpush1.bf16.msra.mxu0 %v1136
      %1364 = vmatprep.mubr.bf16.mxu0 %v557
      %1365 = vmatmul.mubr.bf16.gmra.mrb[0].mxu0 %v556
      %v1366 = vpop.f32.mrb[0].mxu0
      %v1367 = vadd.f32 0.0, %v1366
      %v1368 = vpop.f32.mrb[0].mxu0
      %v1369 = vadd.f32 0.0, %v1368
      %v1370 = vpop.f32.mrb[0].mxu0
      %v1371 = vadd.f32 0.0, %v1370
      %v1372 = vpop.f32.mrb[0].mxu0
      %v1373 = vadd.f32 0.0, %v1372
      %1374 = vmatprep.mubr.bf16.mxu0 %v561
      %1375 = vmatmul.mubr.bf16.gmra.mrb[0].mxu0 %v560
      %v1376 = vpop.f32.mrb[0].mxu0
      %v1377 = vadd.f32 0.0, %v1376
      %v1378 = vpop.f32.mrb[0].mxu0
      %v1379 = vadd.f32 0.0, %v1378
      %v1380 = vpop.f32.mrb[0].mxu0
      %v1381 = vadd.f32 0.0, %v1380
      %v1382 = vpop.f32.mrb[0].mxu0
      %v1383 = vadd.f32 0.0, %v1382
      %1384 = vdwg.mxu0
      %1385 = vmatprep.subr.bf16.mxu0 %v1141
      %1386 = vmatpush1.bf16.msra.mxu0 %v1140
      %1387 = vmatprep.subr.bf16.mxu0 %v1145
      %1388 = vmatpush1.bf16.msra.mxu0 %v1144
      %1389 = vmatprep.subr.bf16.mxu0 %v1149
      %1390 = vmatpush1.bf16.msra.mxu0 %v1148
      %1391 = vmatprep.subr.bf16.mxu0 %v1153
      %1392 = vmatpush1.bf16.msra.mxu0 %v1152
      %1393 = vmatprep.subr.bf16.mxu0 %v1157
      %1394 = vmatpush1.bf16.msra.mxu0 %v1156
      %1395 = vmatprep.subr.bf16.mxu0 %v1161
      %1396 = vmatpush1.bf16.msra.mxu0 %v1160
      %1397 = vmatprep.subr.bf16.mxu0 %v1165
      %1398 = vmatpush1.bf16.msra.mxu0 %v1164
      %1399 = vmatprep.subr.bf16.mxu0 %v1169
      %1400 = vmatpush1.bf16.msra.mxu0 %v1168
      %1401 = vmatprep.subr.bf16.mxu0 %v1173
      %1402 = vmatpush1.bf16.msra.mxu0 %v1172
      %1403 = vmatprep.subr.bf16.mxu0 %v1177
      %1404 = vmatpush1.bf16.msra.mxu0 %v1176
      %1405 = vmatprep.subr.bf16.mxu0 %v1181
      %1406 = vmatpush1.bf16.msra.mxu0 %v1180
      %1407 = vmatprep.subr.bf16.mxu0 %v1185
      %1408 = vmatpush1.bf16.msra.mxu0 %v1184
      %1409 = vmatprep.subr.bf16.mxu0 %v1189
      %1410 = vmatpush1.bf16.msra.mxu0 %v1188
      %1411 = vmatprep.subr.bf16.mxu0 %v1193
      %1412 = vmatpush1.bf16.msra.mxu0 %v1192
      %1413 = vmatprep.subr.bf16.mxu0 %v1197
      %1414 = vmatpush1.bf16.msra.mxu0 %v1196
      %1415 = vmatprep.subr.bf16.mxu0 %v1201
      %1416 = vmatpush1.bf16.msra.mxu0 %v1200
      %1417 = vmatprep.mubr.bf16.mxu0 %v559
      %1418 = vmatmul.mubr.bf16.gmra.mrb[0].mxu0 %v558
      %v1419 = vpop.f32.mrb[0].mxu0
      %v1420 = vadd.f32 %v1367, %v1419
      %v1421 = vpop.f32.mrb[0].mxu0
      %v1422 = vadd.f32 %v1369, %v1421
      %v1423 = vpop.f32.mrb[0].mxu0
      %v1424 = vadd.f32 %v1371, %v1423
      %v1425 = vpop.f32.mrb[0].mxu0
      %v1426 = vadd.f32 %v1373, %v1425
      %1427 = vmatprep.mubr.bf16.mxu0 %v563
      %1428 = vmatmul.mubr.bf16.gmra.mrb[0].mxu0 %v562
      %v1429 = vpop.f32.mrb[0].mxu0
      %v1430 = vadd.f32 %v1377, %v1429
      %v1431 = vpop.f32.mrb[0].mxu0
      %v1432 = vadd.f32 %v1379, %v1431
      %v1433 = vpop.f32.mrb[0].mxu0
      %v1434 = vadd.f32 %v1381, %v1433
      %v1435 = vpop.f32.mrb[0].mxu0
      %v1436 = vadd.f32 %v1383, %v1435
      %1437 = vdwg.mxu0
      %1438 = vmatprep.subr.bf16.mxu0 %v1079
      %1439 = vmatpush1.bf16.msra.mxu0 %v1078
      %1440 = vmatprep.subr.bf16.mxu0 %v1083
      %1441 = vmatpush1.bf16.msra.mxu0 %v1082
      %1442 = vmatprep.subr.bf16.mxu0 %v1087
      %1443 = vmatpush1.bf16.msra.mxu0 %v1086
      %1444 = vmatprep.subr.bf16.mxu0 %v1091
      %1445 = vmatpush1.bf16.msra.mxu0 %v1090
      %1446 = vmatprep.subr.bf16.mxu0 %v1095
      %1447 = vmatpush1.bf16.msra.mxu0 %v1094
      %1448 = vmatprep.subr.bf16.mxu0 %v1099
      %1449 = vmatpush1.bf16.msra.mxu0 %v1098
      %1450 = vmatprep.subr.bf16.mxu0 %v1103
      %1451 = vmatpush1.bf16.msra.mxu0 %v1102
      %1452 = vmatprep.subr.bf16.mxu0 %v1107
      %1453 = vmatpush1.bf16.msra.mxu0 %v1106
      %1454 = vmatprep.subr.bf16.mxu0 %v1111
      %1455 = vmatpush1.bf16.msra.mxu0 %v1110
      %1456 = vmatprep.subr.bf16.mxu0 %v1115
      %1457 = vmatpush1.bf16.msra.mxu0 %v1114
      %1458 = vmatprep.subr.bf16.mxu0 %v1119
      %1459 = vmatpush1.bf16.msra.mxu0 %v1118
      %1460 = vmatprep.subr.bf16.mxu0 %v1123
      %1461 = vmatpush1.bf16.msra.mxu0 %v1122
      %1462 = vmatprep.subr.bf16.mxu0 %v1127
      %1463 = vmatpush1.bf16.msra.mxu0 %v1126
      %1464 = vmatprep.subr.bf16.mxu0 %v1131
      %1465 = vmatpush1.bf16.msra.mxu0 %v1130
      %1466 = vmatprep.subr.bf16.mxu0 %v1135
      %1467 = vmatpush1.bf16.msra.mxu0 %v1134
      %1468 = vmatprep.subr.bf16.mxu0 %v1139
      %1469 = vmatpush1.bf16.msra.mxu0 %v1138
      %1470 = vmatprep.mubr.bf16.mxu0 %v557
      %1471 = vmatmul.mubr.bf16.gmra.mrb[0].mxu0 %v556
      %v1472 = vpop.f32.mrb[0].mxu0
      %v1473 = vadd.f32 0.0, %v1472
      %v1474 = vpop.f32.mrb[0].mxu0
      %v1475 = vadd.f32 0.0, %v1474
      %v1476 = vpop.f32.mrb[0].mxu0
      %v1477 = vadd.f32 0.0, %v1476
      %v1478 = vpop.f32.mrb[0].mxu0
      %v1479 = vadd.f32 0.0, %v1478
      %1480 = vmatprep.mubr.bf16.mxu0 %v561
      %1481 = vmatmul.mubr.bf16.gmra.mrb[0].mxu0 %v560
      %v1482 = vpop.f32.mrb[0].mxu0
      %v1483 = vadd.f32 0.0, %v1482
      %v1484 = vpop.f32.mrb[0].mxu0
      %v1485 = vadd.f32 0.0, %v1484
      %v1486 = vpop.f32.mrb[0].mxu0
      %v1487 = vadd.f32 0.0, %v1486
      %v1488 = vpop.f32.mrb[0].mxu0
      %v1489 = vadd.f32 0.0, %v1488
      %1490 = vdwg.mxu0
      %1491 = vmatprep.subr.bf16.mxu0 %v1143
      %1492 = vmatpush1.bf16.msra.mxu0 %v1142
      %1493 = vmatprep.subr.bf16.mxu0 %v1147
      %1494 = vmatpush1.bf16.msra.mxu0 %v1146
      %1495 = vmatprep.subr.bf16.mxu0 %v1151
      %1496 = vmatpush1.bf16.msra.mxu0 %v1150
      %1497 = vmatprep.subr.bf16.mxu0 %v1155
      %1498 = vmatpush1.bf16.msra.mxu0 %v1154
      %1499 = vmatprep.subr.bf16.mxu0 %v1159
      %1500 = vmatpush1.bf16.msra.mxu0 %v1158
      %1501 = vmatprep.subr.bf16.mxu0 %v1163
      %1502 = vmatpush1.bf16.msra.mxu0 %v1162
      %1503 = vmatprep.subr.bf16.mxu0 %v1167
      %1504 = vmatpush1.bf16.msra.mxu0 %v1166
      %1505 = vmatprep.subr.bf16.mxu0 %v1171
      %1506 = vmatpush1.bf16.msra.mxu0 %v1170
      %1507 = vmatprep.subr.bf16.mxu0 %v1175
      %1508 = vmatpush1.bf16.msra.mxu0 %v1174
      %1509 = vmatprep.subr.bf16.mxu0 %v1179
      %1510 = vmatpush1.bf16.msra.mxu0 %v1178
      %1511 = vmatprep.subr.bf16.mxu0 %v1183
      %1512 = vmatpush1.bf16.msra.mxu0 %v1182
      %1513 = vmatprep.subr.bf16.mxu0 %v1187
      %1514 = vmatpush1.bf16.msra.mxu0 %v1186
      %1515 = vmatprep.subr.bf16.mxu0 %v1191
      %1516 = vmatpush1.bf16.msra.mxu0 %v1190
      %1517 = vmatprep.subr.bf16.mxu0 %v1195
      %1518 = vmatpush1.bf16.msra.mxu0 %v1194
      %1519 = vmatprep.subr.bf16.mxu0 %v1199
      %1520 = vmatpush1.bf16.msra.mxu0 %v1198
      %1521 = vmatprep.subr.bf16.mxu0 %v1203
      %1522 = vmatpush1.bf16.msra.mxu0 %v1202
      %1523 = vmatprep.mubr.bf16.mxu0 %v559
      %1524 = vmatmul.mubr.bf16.gmra.mrb[0].mxu0 %v558
      %v1525 = vpop.f32.mrb[0].mxu0
      %v1526 = vadd.f32 %v1473, %v1525
      %v1527 = vpop.f32.mrb[0].mxu0
      %v1528 = vadd.f32 %v1475, %v1527
      %v1529 = vpop.f32.mrb[0].mxu0
      %v1530 = vadd.f32 %v1477, %v1529
      %v1531 = vpop.f32.mrb[0].mxu0
      %v1532 = vadd.f32 %v1479, %v1531
      %1533 = vmatprep.mubr.bf16.mxu0 %v563
      %1534 = vmatmul.mubr.bf16.gmra.mrb[0].mxu0 %v562
      %v1535 = vpop.f32.mrb[0].mxu0
      %v1536 = vadd.f32 %v1483, %v1535
      %v1537 = vpop.f32.mrb[0].mxu0
      %v1538 = vadd.f32 %v1485, %v1537
      %v1539 = vpop.f32.mrb[0].mxu0
      %v1540 = vadd.f32 %v1487, %v1539
      %v1541 = vpop.f32.mrb[0].mxu0
      %v1542 = vadd.f32 %v1489, %v1541
      %1543 = vdwg.mxu0
      %v1544 = vld [vmem:[%s5] sm:$0xf]
      %v1545 = vld [vmem:[%s6] sm:$0xf]
      %v1546 = vadd.f32 %v1420, %v1424
      %v1547 = vadd.f32 %v1546, %v1430
      %v1548 = vadd.f32 %v1547, %v1434
      %v1549 = vrot.slane %v1548, 4
      %v1550 = vadd.f32 %v1548, %v1549
      %v1551 = vrot.slane %v1550, 2
      %v1552 = vadd.f32 %v1550, %v1551
      %v1553 = vrot.slane %v1552, 1
      %v1554 = vadd.f32 %v1552, %v1553
      %v1555 = vadd.f32 %v1422, %v1426
      %v1556 = vadd.f32 %v1555, %v1432
      %v1557 = vadd.f32 %v1556, %v1436
      %v1558 = vrot.slane %v1557, 4
      %v1559 = vadd.f32 %v1557, %v1558
      %v1560 = vrot.slane %v1559, 2
      %v1561 = vadd.f32 %v1559, %v1560
      %v1562 = vrot.slane %v1561, 1
      %v1563 = vadd.f32 %v1561, %v1562
      %v1564 = vadd.f32 %v1526, %v1530
      %v1565 = vadd.f32 %v1564, %v1536
      %v1566 = vadd.f32 %v1565, %v1540
      %v1567 = vrot.slane %v1566, 4
      %v1568 = vadd.f32 %v1566, %v1567
      %v1569 = vrot.slane %v1568, 2
      %v1570 = vadd.f32 %v1568, %v1569
      %v1571 = vrot.slane %v1570, 1
      %v1572 = vadd.f32 %v1570, %v1571
      %v1573 = vadd.f32 %v1528, %v1532
      %v1574 = vadd.f32 %v1573, %v1538
      %v1575 = vadd.f32 %v1574, %v1542
      %v1576 = vrot.slane %v1575, 4
      %v1577 = vadd.f32 %v1575, %v1576
      %v1578 = vrot.slane %v1577, 2
      %v1579 = vadd.f32 %v1577, %v1578
      %v1580 = vrot.slane %v1579, 1
      %v1581 = vadd.f32 %v1579, %v1580
      %v1582 = vmul.f32 %v1554, %v317
      %v1583 = vmul.f32 %v1563, %v317
      %v1584 = vmul.f32 %v1572, %v317
      %v1585 = vmul.f32 %v1581, %v317
      %v1586 = vsub.f32 %v1420, %v1582
      %v1587 = vsub.f32 %v1422, %v1583
      %v1588 = vsub.f32 %v1526, %v1584
      %v1589 = vsub.f32 %v1528, %v1585
      %v1590 = vsub.f32 %v1424, %v1582
      %v1591 = vsub.f32 %v1426, %v1583
      %v1592 = vsub.f32 %v1530, %v1584
      %v1593 = vsub.f32 %v1532, %v1585
      %v1594 = vsub.f32 %v1430, %v1582
      %v1595 = vsub.f32 %v1432, %v1583
      %v1596 = vsub.f32 %v1536, %v1584
      %v1597 = vsub.f32 %v1538, %v1585
      %v1598 = vsub.f32 %v1434, %v1582
      %v1599 = vsub.f32 %v1436, %v1583
      %v1600 = vsub.f32 %v1540, %v1584
      %v1601 = vsub.f32 %v1542, %v1585
      %v1602 = vmul.f32 %v1586, %v1586
      %v1603 = vmul.f32 %v1587, %v1587
      %v1604 = vmul.f32 %v1588, %v1588
      %v1605 = vmul.f32 %v1589, %v1589
      %v1606 = vmul.f32 %v1590, %v1590
      %v1607 = vmul.f32 %v1591, %v1591
      %v1608 = vmul.f32 %v1592, %v1592
      %v1609 = vmul.f32 %v1593, %v1593
      %v1610 = vmul.f32 %v1594, %v1594
      %v1611 = vmul.f32 %v1595, %v1595
      %v1612 = vmul.f32 %v1596, %v1596
      %v1613 = vmul.f32 %v1597, %v1597
      %v1614 = vmul.f32 %v1598, %v1598
      %v1615 = vmul.f32 %v1599, %v1599
      %v1616 = vmul.f32 %v1600, %v1600
      %v1617 = vmul.f32 %v1601, %v1601
      %v1618 = vadd.f32 %v1602, %v1606
      %v1619 = vadd.f32 %v1618, %v1610
      %v1620 = vadd.f32 %v1619, %v1614
      %v1621 = vrot.slane %v1620, 4
      %v1622 = vadd.f32 %v1620, %v1621
      %v1623 = vrot.slane %v1622, 2
      %v1624 = vadd.f32 %v1622, %v1623
      %v1625 = vrot.slane %v1624, 1
      %v1626 = vadd.f32 %v1624, %v1625
      %v1627 = vadd.f32 %v1603, %v1607
      %v1628 = vadd.f32 %v1627, %v1611
      %v1629 = vadd.f32 %v1628, %v1615
      %v1630 = vrot.slane %v1629, 4
      %v1631 = vadd.f32 %v1629, %v1630
      %v1632 = vrot.slane %v1631, 2
      %v1633 = vadd.f32 %v1631, %v1632
      %v1634 = vrot.slane %v1633, 1
      %v1635 = vadd.f32 %v1633, %v1634
      %v1636 = vadd.f32 %v1604, %v1608
      %v1637 = vadd.f32 %v1636, %v1612
      %v1638 = vadd.f32 %v1637, %v1616
      %v1639 = vrot.slane %v1638, 4
      %v1640 = vadd.f32 %v1638, %v1639
      %v1641 = vrot.slane %v1640, 2
      %v1642 = vadd.f32 %v1640, %v1641
      %v1643 = vrot.slane %v1642, 1
      %v1644 = vadd.f32 %v1642, %v1643
      %v1645 = vadd.f32 %v1605, %v1609
      %v1646 = vadd.f32 %v1645, %v1613
      %v1647 = vadd.f32 %v1646, %v1617
      %v1648 = vrot.slane %v1647, 4
      %v1649 = vadd.f32 %v1647, %v1648
      %v1650 = vrot.slane %v1649, 2
      %v1651 = vadd.f32 %v1649, %v1650
      %v1652 = vrot.slane %v1651, 1
      %v1653 = vadd.f32 %v1651, %v1652
      %v1654 = vmul.f32 %v1626, %v317
      %v1655 = vmul.f32 %v1635, %v317
      %v1656 = vmul.f32 %v1644, %v317
      %v1657 = vmul.f32 %v1653, %v317
      %v1658 = vadd.f32 %v1654, 1e-05
      %v1659 = vadd.f32 %v1655, 1e-05
      %v1660 = vadd.f32 %v1656, 1e-05
      %v1661 = vadd.f32 %v1657, 1e-05
      %v1662 = vrsqrt.pop %v1658
      %v1663 = vrsqrt.pop %v1659
      %v1664 = vrsqrt.pop %v1660
      %v1665 = vrsqrt.pop %v1661
      %v1670 = vcombine.low %v1662, %v1663
      %v1671 = vcombine.low %v1664, %v1665
      %v1673 = vunpack.c.l.s4 1966171168
      %v1674 = vunpack.c.0.s8 %v1673
      %v1675 = vlaneseq
      %v1676 = vshrl.u32 %v1675, 7
      %v1677 = vsub.s32 %v1674, %v1676
      %v1678 = vrot.slane %v1670, %v1677
      %v1680 = vunpack.c.l.s4 1966171168
      %v1681 = vunpack.c.0.s8 %v1680
      %v1682 = vlaneseq
      %v1683 = vshrl.u32 %v1682, 7
      %v1684 = vsub.s32 %v1681, %v1683
      %v1685 = vrot.slane %v1671, %v1684
      %v1686 = vcombine.low %v1678, %v1685
      %v1688 = vunpack.c.l.s4 1966171168
      %v1689 = vunpack.c.0.s8 %v1688
      %v1690 = vlaneseq
      %v1691 = vshrl.u32 %v1690, 7
      %v1692 = vsub.s32 %v1689, %v1691
      %v1693 = vrot.slane %v1686, %v1692
      %v1695 = vmul.f32 %v1544, %v1693
      %v1697 = vlaneseq
      %v1698 = vshrl.u32 %v1697, 7
      %v1699 = vsub.s32 0, %v1698
      %v1700 = vrot.slane %v1695, %v1699
      %v1701 = vlaneseq
      %v1702 = vshrl.u32 %v1701, 7
      %v1703 = vsub.s32 1, %v1702
      %v1704 = vrot.slane %v1695, %v1703
      %v1705 = vlaneseq
      %v1706 = vshrl.u32 %v1705, 7
      %v1707 = vsub.s32 2, %v1706
      %v1708 = vrot.slane %v1695, %v1707
      %v1709 = vlaneseq
      %v1710 = vshrl.u32 %v1709, 7
      %v1711 = vsub.s32 3, %v1710
      %v1712 = vrot.slane %v1695, %v1711
      %v1717 = vmul.f32 %v1582, %v1700
      %v1718 = vmul.f32 %v1583, %v1704
      %v1719 = vmul.f32 %v1584, %v1708
      %v1720 = vmul.f32 %v1585, %v1712
      %v1725 = vcombine.low %v1717, %v1718
      %v1726 = vcombine.low %v1719, %v1720
      %v1728 = vunpack.c.l.s4 1966171168
      %v1729 = vunpack.c.0.s8 %v1728
      %v1730 = vlaneseq
      %v1731 = vshrl.u32 %v1730, 7
      %v1732 = vsub.s32 %v1729, %v1731
      %v1733 = vrot.slane %v1725, %v1732
      %v1735 = vunpack.c.l.s4 1966171168
      %v1736 = vunpack.c.0.s8 %v1735
      %v1737 = vlaneseq
      %v1738 = vshrl.u32 %v1737, 7
      %v1739 = vsub.s32 %v1736, %v1738
      %v1740 = vrot.slane %v1726, %v1739
      %v1741 = vcombine.low %v1733, %v1740
      %v1743 = vunpack.c.l.s4 1966171168
      %v1744 = vunpack.c.0.s8 %v1743
      %v1745 = vlaneseq
      %v1746 = vshrl.u32 %v1745, 7
      %v1747 = vsub.s32 %v1744, %v1746
      %v1748 = vrot.slane %v1741, %v1747
      %v1750 = vsub.f32 %v1545, %v1748
      %v1751 = vmul.f32 %v1420, %v1700
      %v1752 = vmul.f32 %v1422, %v1704
      %v1753 = vmul.f32 %v1526, %v1708
      %v1754 = vmul.f32 %v1528, %v1712
      %v1755 = vmul.f32 %v1424, %v1700
      %v1756 = vmul.f32 %v1426, %v1704
      %v1757 = vmul.f32 %v1530, %v1708
      %v1758 = vmul.f32 %v1532, %v1712
      %v1759 = vmul.f32 %v1430, %v1700
      %v1760 = vmul.f32 %v1432, %v1704
      %v1761 = vmul.f32 %v1536, %v1708
      %v1762 = vmul.f32 %v1538, %v1712
      %v1763 = vmul.f32 %v1434, %v1700
      %v1764 = vmul.f32 %v1436, %v1704
      %v1765 = vmul.f32 %v1540, %v1708
      %v1766 = vmul.f32 %v1542, %v1712
      %v1768 = vlaneseq
      %v1769 = vshrl.u32 %v1768, 7
      %v1770 = vsub.s32 0, %v1769
      %v1771 = vrot.slane %v1750, %v1770
      %v1772 = vlaneseq
      %v1773 = vshrl.u32 %v1772, 7
      %v1774 = vsub.s32 1, %v1773
      %v1775 = vrot.slane %v1750, %v1774
      %v1776 = vlaneseq
      %v1777 = vshrl.u32 %v1776, 7
      %v1778 = vsub.s32 2, %v1777
      %v1779 = vrot.slane %v1750, %v1778
      %v1780 = vlaneseq
      %v1781 = vshrl.u32 %v1780, 7
      %v1782 = vsub.s32 3, %v1781
      %v1783 = vrot.slane %v1750, %v1782
      %v1788 = vadd.f32 %v1751, %v1771
      %v1789 = vadd.f32 %v1752, %v1775
      %v1790 = vadd.f32 %v1753, %v1779
      %v1791 = vadd.f32 %v1754, %v1783
      %v1792 = vadd.f32 %v1755, %v1771
      %v1793 = vadd.f32 %v1756, %v1775
      %v1794 = vadd.f32 %v1757, %v1779
      %v1795 = vadd.f32 %v1758, %v1783
      %v1796 = vadd.f32 %v1759, %v1771
      %v1797 = vadd.f32 %v1760, %v1775
      %v1798 = vadd.f32 %v1761, %v1779
      %v1799 = vadd.f32 %v1762, %v1783
      %v1800 = vadd.f32 %v1763, %v1771
      %v1801 = vadd.f32 %v1764, %v1775
      %v1802 = vadd.f32 %v1765, %v1779
      %v1803 = vadd.f32 %v1766, %v1783
      %v1804 = vmax.f32 %v1788, 0.0
      %v1805 = vmax.f32 %v1789, 0.0
      %v1806 = vmax.f32 %v1790, 0.0
      %v1807 = vmax.f32 %v1791, 0.0
      %v1808 = vmax.f32 %v1792, 0.0
      %v1809 = vmax.f32 %v1793, 0.0
      %v1810 = vmax.f32 %v1794, 0.0
      %v1811 = vmax.f32 %v1795, 0.0
      %v1812 = vmax.f32 %v1796, 0.0
      %v1813 = vmax.f32 %v1797, 0.0
      %v1814 = vmax.f32 %v1798, 0.0
      %v1815 = vmax.f32 %v1799, 0.0
      %v1816 = vmax.f32 %v1800, 0.0
      %v1817 = vmax.f32 %v1801, 0.0
      %v1818 = vmax.f32 %v1802, 0.0
      %v1819 = vmax.f32 %v1803, 0.0
      %v1820 = vpack.c.bf16 %v1808, %v1804
      %v1821 = vpack.c.bf16 %v1809, %v1805
      %v1822 = vpack.c.bf16 %v1810, %v1806
      %v1823 = vpack.c.bf16 %v1811, %v1807
      %v1824 = vpack.c.bf16 %v1816, %v1812
      %v1825 = vpack.c.bf16 %v1817, %v1813
      %v1826 = vpack.c.bf16 %v1818, %v1814
      %v1827 = vpack.c.bf16 %v1819, %v1815
      %1828 = vst [vmem:[#allocation2] sm:$0xff] %v1820
      %1829 = vst [vmem:[#allocation2 + $0x8] sm:$0xff] %v1821
      %1830 = vst [vmem:[#allocation2 + $0x10] sm:$0xff] %v1822
      %1831 = vst [vmem:[#allocation2 + $0x18] sm:$0xff] %v1823
      %1832 = vst [vmem:[#allocation2 + $0x20] sm:$0xff] %v1824
      %1833 = vst [vmem:[#allocation2 + $0x28] sm:$0xff] %v1825
      %1834 = vst [vmem:[#allocation2 + $0x30] sm:$0xff] %v1826
      %1835 = vst [vmem:[#allocation2 + $0x38] sm:$0xff] %v1827
    $region61: #{tpu_custom_call.1} parent=1 // pred_fallthru
      _
    %v1836 = vld [vmem:[#allocation2] sm:$0xff]
    %v1837 = vld [vmem:[#allocation2 + $0x8] sm:$0xff]
    %v1838 = vld [vmem:[#allocation2 + $0x10] sm:$0xff]
    %v1839 = vld [vmem:[#allocation2 + $0x18] sm:$0xff]
    %v1840 = vld [vmem:[#allocation2 + $0x20] sm:$0xff]
    %v1841 = vld [vmem:[#allocation2 + $0x28] sm:$0xff]
    %v1842 = vld [vmem:[#allocation2 + $0x30] sm:$0xff]
    %v1843 = vld [vmem:[#allocation2 + $0x38] sm:$0xff]
    %v1844 = vld [vmem:[#allocation11] sm:$0xff]
    %v1845 = vld [vmem:[#allocation11 + $0x8] sm:$0xff]
    %v1846 = vld [vmem:[#allocation11 + $0x10] sm:$0xff]
    %v1847 = vld [vmem:[#allocation11 + $0x18] sm:$0xff]
    %v1848 = vld [vmem:[#allocation11 + $0x20] sm:$0xff]
    %v1849 = vld [vmem:[#allocation11 + $0x28] sm:$0xff]
    %v1850 = vld [vmem:[#allocation11 + $0x30] sm:$0xff]
    %v1851 = vld [vmem:[#allocation11 + $0x38] sm:$0xff]
    %v1852 = vld [vmem:[#allocation11 + $0x40] sm:$0xff]
    %v1853 = vld [vmem:[#allocation11 + $0x48] sm:$0xff]
    %v1854 = vld [vmem:[#allocation11 + $0x50] sm:$0xff]
    %v1855 = vld [vmem:[#allocation11 + $0x58] sm:$0xff]
    %v1856 = vld [vmem:[#allocation11 + $0x60] sm:$0xff]
    %v1857 = vld [vmem:[#allocation11 + $0x68] sm:$0xff]
    %v1858 = vld [vmem:[#allocation11 + $0x70] sm:$0xff]
    %v1859 = vld [vmem:[#allocation11 + $0x78] sm:$0xff]
    %v1860 = vld [vmem:[#allocation11 + $0x80] sm:$0xff]
    %v1861 = vld [vmem:[#allocation11 + $0x88] sm:$0xff]
    %v1862 = vld [vmem:[#allocation11 + $0x90] sm:$0xff]
    %v1863 = vld [vmem:[#allocation11 + $0x98] sm:$0xff]
    %v1864 = vld [vmem:[#allocation11 + $0xa0] sm:$0xff]
    %v1865 = vld [vmem:[#allocation11 + $0xa8] sm:$0xff]
    %v1866 = vld [vmem:[#allocation11 + $0xb0] sm:$0xff]
    %v1867 = vld [vmem:[#allocation11 + $0xb8] sm:$0xff]
    %v1868 = vld [vmem:[#allocation11 + $0xc0] sm:$0xff]
    %v1869 = vld [vmem:[#allocation11 + $0xc8] sm:$0xff]
    %v1870 = vld [vmem:[#allocation11 + $0xd0] sm:$0xff]
    %v1871 = vld [vmem:[#allocation11 + $0xd8] sm:$0xff]
    %v1872 = vld [vmem:[#allocation11 + $0xe0] sm:$0xff]
    %v1873 = vld [vmem:[#allocation11 + $0xe8] sm:$0xff]
    %v1874 = vld [vmem:[#allocation11 + $0xf0] sm:$0xff]
    %v1875 = vld [vmem:[#allocation11 + $0xf8] sm:$0xff]
    %v1876 = vld [vmem:[#allocation11 + $0x100] sm:$0xff]
    %v1877 = vld [vmem:[#allocation11 + $0x108] sm:$0xff]
    %v1878 = vld [vmem:[#allocation11 + $0x110] sm:$0xff]
    %v1879 = vld [vmem:[#allocation11 + $0x118] sm:$0xff]
    %v1880 = vld [vmem:[#allocation11 + $0x120] sm:$0xff]
    %v1881 = vld [vmem:[#allocation11 + $0x128] sm:$0xff]
    %v1882 = vld [vmem:[#allocation11 + $0x130] sm:$0xff]
    %v1883 = vld [vmem:[#allocation11 + $0x138] sm:$0xff]
    %v1884 = vld [vmem:[#allocation11 + $0x140] sm:$0xff]
    %v1885 = vld [vmem:[#allocation11 + $0x148] sm:$0xff]
    %v1886 = vld [vmem:[#allocation11 + $0x150] sm:$0xff]
    %v1887 = vld [vmem:[#allocation11 + $0x158] sm:$0xff]
    %v1888 = vld [vmem:[#allocation11 + $0x160] sm:$0xff]
    %v1889 = vld [vmem:[#allocation11 + $0x168] sm:$0xff]
    %v1890 = vld [vmem:[#allocation11 + $0x170] sm:$0xff]
    %v1891 = vld [vmem:[#allocation11 + $0x178] sm:$0xff]
    %v1892 = vld [vmem:[#allocation11 + $0x180] sm:$0xff]
    %v1893 = vld [vmem:[#allocation11 + $0x188] sm:$0xff]
    %v1894 = vld [vmem:[#allocation11 + $0x190] sm:$0xff]
    %v1895 = vld [vmem:[#allocation11 + $0x198] sm:$0xff]
    %v1896 = vld [vmem:[#allocation11 + $0x1a0] sm:$0xff]
    %v1897 = vld [vmem:[#allocation11 + $0x1a8] sm:$0xff]
    %v1898 = vld [vmem:[#allocation11 + $0x1b0] sm:$0xff]
    %v1899 = vld [vmem:[#allocation11 + $0x1b8] sm:$0xff]
    %v1900 = vld [vmem:[#allocation11 + $0x1c0] sm:$0xff]
    %v1901 = vld [vmem:[#allocation11 + $0x1c8] sm:$0xff]
    %v1902 = vld [vmem:[#allocation11 + $0x1d0] sm:$0xff]
    %v1903 = vld [vmem:[#allocation11 + $0x1d8] sm:$0xff]
    %v1904 = vld [vmem:[#allocation11 + $0x1e0] sm:$0xff]
    %v1905 = vld [vmem:[#allocation11 + $0x1e8] sm:$0xff]
    %v1906 = vld [vmem:[#allocation11 + $0x1f0] sm:$0xff]
    %v1907 = vld [vmem:[#allocation11 + $0x1f8] sm:$0xff]
    %v1908 = vld [vmem:[#allocation11 + $0x200] sm:$0xff]
    %v1909 = vld [vmem:[#allocation11 + $0x208] sm:$0xff]
    %v1910 = vld [vmem:[#allocation11 + $0x210] sm:$0xff]
    %v1911 = vld [vmem:[#allocation11 + $0x218] sm:$0xff]
    %v1912 = vld [vmem:[#allocation11 + $0x220] sm:$0xff]
    %v1913 = vld [vmem:[#allocation11 + $0x228] sm:$0xff]
    %v1914 = vld [vmem:[#allocation11 + $0x230] sm:$0xff]
    %v1915 = vld [vmem:[#allocation11 + $0x238] sm:$0xff]
    %v1916 = vld [vmem:[#allocation11 + $0x240] sm:$0xff]
    %v1917 = vld [vmem:[#allocation11 + $0x248] sm:$0xff]
    %v1918 = vld [vmem:[#allocation11 + $0x250] sm:$0xff]
    %v1919 = vld [vmem:[#allocation11 + $0x258] sm:$0xff]
    %v1920 = vld [vmem:[#allocation11 + $0x260] sm:$0xff]
    %v1921 = vld [vmem:[#allocation11 + $0x268] sm:$0xff]
    %v1922 = vld [vmem:[#allocation11 + $0x270] sm:$0xff]
    %v1923 = vld [vmem:[#allocation11 + $0x278] sm:$0xff]
    %v1924 = vld [vmem:[#allocation11 + $0x280] sm:$0xff]
    %v1925 = vld [vmem:[#allocation11 + $0x288] sm:$0xff]
    %v1926 = vld [vmem:[#allocation11 + $0x290] sm:$0xff]
    %v1927 = vld [vmem:[#allocation11 + $0x298] sm:$0xff]
    %v1928 = vld [vmem:[#allocation11 + $0x2a0] sm:$0xff]
    %v1929 = vld [vmem:[#allocation11 + $0x2a8] sm:$0xff]
    %v1930 = vld [vmem:[#allocation11 + $0x2b0] sm:$0xff]
    %v1931 = vld [vmem:[#allocation11 + $0x2b8] sm:$0xff]
    %v1932 = vld [vmem:[#allocation11 + $0x2c0] sm:$0xff]
    %v1933 = vld [vmem:[#allocation11 + $0x2c8] sm:$0xff]
    %v1934 = vld [vmem:[#allocation11 + $0x2d0] sm:$0xff]
    %v1935 = vld [vmem:[#allocation11 + $0x2d8] sm:$0xff]
    %v1936 = vld [vmem:[#allocation11 + $0x2e0] sm:$0xff]
    %v1937 = vld [vmem:[#allocation11 + $0x2e8] sm:$0xff]
    %v1938 = vld [vmem:[#allocation11 + $0x2f0] sm:$0xff]
    %v1939 = vld [vmem:[#allocation11 + $0x2f8] sm:$0xff]
    %v1940 = vld [vmem:[#allocation11 + $0x300] sm:$0xff]
    %v1941 = vld [vmem:[#allocation11 + $0x308] sm:$0xff]
    %v1942 = vld [vmem:[#allocation11 + $0x310] sm:$0xff]
    %v1943 = vld [vmem:[#allocation11 + $0x318] sm:$0xff]
    %v1944 = vld [vmem:[#allocation11 + $0x320] sm:$0xff]
    %v1945 = vld [vmem:[#allocation11 + $0x328] sm:$0xff]
    %v1946 = vld [vmem:[#allocation11 + $0x330] sm:$0xff]
    %v1947 = vld [vmem:[#allocation11 + $0x338] sm:$0xff]
    %v1948 = vld [vmem:[#allocation11 + $0x340] sm:$0xff]
    %v1949 = vld [vmem:[#allocation11 + $0x348] sm:$0xff]
    %v1950 = vld [vmem:[#allocation11 + $0x350] sm:$0xff]
    %v1951 = vld [vmem:[#allocation11 + $0x358] sm:$0xff]
    %v1952 = vld [vmem:[#allocation11 + $0x360] sm:$0xff]
    %v1953 = vld [vmem:[#allocation11 + $0x368] sm:$0xff]
    %v1954 = vld [vmem:[#allocation11 + $0x370] sm:$0xff]
    %v1955 = vld [vmem:[#allocation11 + $0x378] sm:$0xff]
    %v1956 = vld [vmem:[#allocation11 + $0x380] sm:$0xff]
    %v1957 = vld [vmem:[#allocation11 + $0x388] sm:$0xff]
    %v1958 = vld [vmem:[#allocation11 + $0x390] sm:$0xff]
    %v1959 = vld [vmem:[#allocation11 + $0x398] sm:$0xff]
    %v1960 = vld [vmem:[#allocation11 + $0x3a0] sm:$0xff]
    %v1961 = vld [vmem:[#allocation11 + $0x3a8] sm:$0xff]
    %v1962 = vld [vmem:[#allocation11 + $0x3b0] sm:$0xff]
    %v1963 = vld [vmem:[#allocation11 + $0x3b8] sm:$0xff]
    %v1964 = vld [vmem:[#allocation11 + $0x3c0] sm:$0xff]
    %v1965 = vld [vmem:[#allocation11 + $0x3c8] sm:$0xff]
    %v1966 = vld [vmem:[#allocation11 + $0x3d0] sm:$0xff]
    %v1967 = vld [vmem:[#allocation11 + $0x3d8] sm:$0xff]
    %v1968 = vld [vmem:[#allocation11 + $0x3e0] sm:$0xff]
    %v1969 = vld [vmem:[#allocation11 + $0x3e8] sm:$0xff]
    %v1970 = vld [vmem:[#allocation11 + $0x3f0] sm:$0xff]
    %v1971 = vld [vmem:[#allocation11 + $0x3f8] sm:$0xff]
    %v1972 = vld [vmem:[#allocation11 + $0x400] sm:$0xff]
    %v1973 = vld [vmem:[#allocation11 + $0x408] sm:$0xff]
    %v1974 = vld [vmem:[#allocation11 + $0x410] sm:$0xff]
    %v1975 = vld [vmem:[#allocation11 + $0x418] sm:$0xff]
    %v1976 = vld [vmem:[#allocation11 + $0x420] sm:$0xff]
    %v1977 = vld [vmem:[#allocation11 + $0x428] sm:$0xff]
    %v1978 = vld [vmem:[#allocation11 + $0x430] sm:$0xff]
    %v1979 = vld [vmem:[#allocation11 + $0x438] sm:$0xff]
    %v1980 = vld [vmem:[#allocation11 + $0x440] sm:$0xff]
    %v1981 = vld [vmem:[#allocation11 + $0x448] sm:$0xff]
    %v1982 = vld [vmem:[#allocation11 + $0x450] sm:$0xff]
    %v1983 = vld [vmem:[#allocation11 + $0x458] sm:$0xff]
    %v1984 = vld [vmem:[#allocation11 + $0x460] sm:$0xff]
    %v1985 = vld [vmem:[#allocation11 + $0x468] sm:$0xff]
    %v1986 = vld [vmem:[#allocation11 + $0x470] sm:$0xff]
    %v1987 = vld [vmem:[#allocation11 + $0x478] sm:$0xff]
    %v1988 = vld [vmem:[#allocation11 + $0x480] sm:$0xff]
    %v1989 = vld [vmem:[#allocation11 + $0x488] sm:$0xff]
    %v1990 = vld [vmem:[#allocation11 + $0x490] sm:$0xff]
    %v1991 = vld [vmem:[#allocation11 + $0x498] sm:$0xff]
    %v1992 = vld [vmem:[#allocation11 + $0x4a0] sm:$0xff]
    %v1993 = vld [vmem:[#allocation11 + $0x4a8] sm:$0xff]
    %v1994 = vld [vmem:[#allocation11 + $0x4b0] sm:$0xff]
    %v1995 = vld [vmem:[#allocation11 + $0x4b8] sm:$0xff]
    %v1996 = vld [vmem:[#allocation11 + $0x4c0] sm:$0xff]
    %v1997 = vld [vmem:[#allocation11 + $0x4c8] sm:$0xff]
    %v1998 = vld [vmem:[#allocation11 + $0x4d0] sm:$0xff]
    %v1999 = vld [vmem:[#allocation11 + $0x4d8] sm:$0xff]
    %v2000 = vld [vmem:[#allocation11 + $0x4e0] sm:$0xff]
    %v2001 = vld [vmem:[#allocation11 + $0x4e8] sm:$0xff]
    %v2002 = vld [vmem:[#allocation11 + $0x4f0] sm:$0xff]
    %v2003 = vld [vmem:[#allocation11 + $0x4f8] sm:$0xff]
    %v2004 = vld [vmem:[#allocation11 + $0x500] sm:$0xff]
    %v2005 = vld [vmem:[#allocation11 + $0x508] sm:$0xff]
    %v2006 = vld [vmem:[#allocation11 + $0x510] sm:$0xff]
    %v2007 = vld [vmem:[#allocation11 + $0x518] sm:$0xff]
    %v2008 = vld [vmem:[#allocation11 + $0x520] sm:$0xff]
    %v2009 = vld [vmem:[#allocation11 + $0x528] sm:$0xff]
    %v2010 = vld [vmem:[#allocation11 + $0x530] sm:$0xff]
    %v2011 = vld [vmem:[#allocation11 + $0x538] sm:$0xff]
    %v2012 = vld [vmem:[#allocation11 + $0x540] sm:$0xff]
    %v2013 = vld [vmem:[#allocation11 + $0x548] sm:$0xff]
    %v2014 = vld [vmem:[#allocation11 + $0x550] sm:$0xff]
    %v2015 = vld [vmem:[#allocation11 + $0x558] sm:$0xff]
    %v2016 = vld [vmem:[#allocation11 + $0x560] sm:$0xff]
    %v2017 = vld [vmem:[#allocation11 + $0x568] sm:$0xff]
    %v2018 = vld [vmem:[#allocation11 + $0x570] sm:$0xff]
    %v2019 = vld [vmem:[#allocation11 + $0x578] sm:$0xff]
    %v2020 = vld [vmem:[#allocation11 + $0x580] sm:$0xff]
    %v2021 = vld [vmem:[#allocation11 + $0x588] sm:$0xff]
    %v2022 = vld [vmem:[#allocation11 + $0x590] sm:$0xff]
    %v2023 = vld [vmem:[#allocation11 + $0x598] sm:$0xff]
    %v2024 = vld [vmem:[#allocation11 + $0x5a0] sm:$0xff]
    %v2025 = vld [vmem:[#allocation11 + $0x5a8] sm:$0xff]
    %v2026 = vld [vmem:[#allocation11 + $0x5b0] sm:$0xff]
    %v2027 = vld [vmem:[#allocation11 + $0x5b8] sm:$0xff]
    %v2028 = vld [vmem:[#allocation11 + $0x5c0] sm:$0xff]
    %v2029 = vld [vmem:[#allocation11 + $0x5c8] sm:$0xff]
    %v2030 = vld [vmem:[#allocation11 + $0x5d0] sm:$0xff]
    %v2031 = vld [vmem:[#allocation11 + $0x5d8] sm:$0xff]
    %v2032 = vld [vmem:[#allocation11 + $0x5e0] sm:$0xff]
    %v2033 = vld [vmem:[#allocation11 + $0x5e8] sm:$0xff]
    %v2034 = vld [vmem:[#allocation11 + $0x5f0] sm:$0xff]
    %v2035 = vld [vmem:[#allocation11 + $0x5f8] sm:$0xff]
    %v2036 = vld [vmem:[%s8] sm:$0x3f]
    %v2038 = vlaneseq
    %v2039 = vshrl.u32 %v2038, 7
    %v2040 = vsub.s32 0, %v2039
    %v2041 = vrot.slane %v2036, %v2040
    %v2042 = vlaneseq
    %v2043 = vshrl.u32 %v2042, 7
    %v2044 = vsub.s32 1, %v2043
    %v2045 = vrot.slane %v2036, %v2044
    %v2046 = vlaneseq
    %v2047 = vshrl.u32 %v2046, 7
    %v2048 = vsub.s32 2, %v2047
    %v2049 = vrot.slane %v2036, %v2048
    %v2050 = vlaneseq
    %v2051 = vshrl.u32 %v2050, 7
    %v2052 = vsub.s32 3, %v2051
    %v2053 = vrot.slane %v2036, %v2052
    %v2054 = vlaneseq
    %v2055 = vshrl.u32 %v2054, 7
    %v2056 = vsub.s32 4, %v2055
    %v2057 = vrot.slane %v2036, %v2056
    %v2058 = vlaneseq
    %v2059 = vshrl.u32 %v2058, 7
    %v2060 = vsub.s32 5, %v2059
    %v2061 = vrot.slane %v2036, %v2060
    %v2260 = vunpack.c.l.b16 %v1844
    %v2261 = vunpack.c.h.b16 %v1844
    %v2262 = vunpack.c.l.b16 %v1845
    %v2263 = vunpack.c.h.b16 %v1845
    %v2264 = vunpack.c.l.b16 %v1846
    %v2265 = vunpack.c.h.b16 %v1846
    %v2266 = vunpack.c.l.b16 %v1847
    %v2267 = vunpack.c.h.b16 %v1847
    %v2268 = vunpack.c.l.b16 %v1848
    %v2269 = vunpack.c.h.b16 %v1848
    %v2270 = vunpack.c.l.b16 %v1849
    %v2271 = vunpack.c.h.b16 %v1849
    %v2272 = vunpack.c.l.b16 %v1850
    %v2273 = vunpack.c.h.b16 %v1850
    %v2274 = vunpack.c.l.b16 %v1851
    %v2275 = vunpack.c.h.b16 %v1851
    %v2276 = vunpack.c.l.b16 %v1852
    %v2277 = vunpack.c.h.b16 %v1852
    %v2278 = vunpack.c.l.b16 %v1853
    %v2279 = vunpack.c.h.b16 %v1853
    %v2280 = vunpack.c.l.b16 %v1854
    %v2281 = vunpack.c.h.b16 %v1854
    %v2282 = vunpack.c.l.b16 %v1855
    %v2283 = vunpack.c.h.b16 %v1855
    %v2284 = vunpack.c.l.b16 %v1856
    %v2285 = vunpack.c.h.b16 %v1856
    %v2286 = vunpack.c.l.b16 %v1857
    %v2287 = vunpack.c.h.b16 %v1857
    %v2288 = vunpack.c.l.b16 %v1858
    %v2289 = vunpack.c.h.b16 %v1858
    %v2290 = vunpack.c.l.b16 %v1859
    %v2291 = vunpack.c.h.b16 %v1859
    %v2292 = vunpack.c.l.b16 %v1860
    %v2293 = vunpack.c.h.b16 %v1860
    %v2294 = vunpack.c.l.b16 %v1861
    %v2295 = vunpack.c.h.b16 %v1861
    %v2296 = vunpack.c.l.b16 %v1862
    %v2297 = vunpack.c.h.b16 %v1862
    %v2298 = vunpack.c.l.b16 %v1863
    %v2299 = vunpack.c.h.b16 %v1863
    %v2300 = vunpack.c.l.b16 %v1864
    %v2301 = vunpack.c.h.b16 %v1864
    %v2302 = vunpack.c.l.b16 %v1865
    %v2303 = vunpack.c.h.b16 %v1865
    %v2304 = vunpack.c.l.b16 %v1866
    %v2305 = vunpack.c.h.b16 %v1866
    %v2306 = vunpack.c.l.b16 %v1867
    %v2307 = vunpack.c.h.b16 %v1867
    %v2308 = vunpack.c.l.b16 %v1868
    %v2309 = vunpack.c.h.b16 %v1868
    %v2310 = vunpack.c.l.b16 %v1869
    %v2311 = vunpack.c.h.b16 %v1869
    %v2312 = vunpack.c.l.b16 %v1870
    %v2313 = vunpack.c.h.b16 %v1870
    %v2314 = vunpack.c.l.b16 %v1871
    %v2315 = vunpack.c.h.b16 %v1871
    %v2316 = vunpack.c.l.b16 %v1872
    %v2317 = vunpack.c.h.b16 %v1872
    %v2318 = vunpack.c.l.b16 %v1873
    %v2319 = vunpack.c.h.b16 %v1873
    %v2320 = vunpack.c.l.b16 %v1874
    %v2321 = vunpack.c.h.b16 %v1874
    %v2322 = vunpack.c.l.b16 %v1875
    %v2323 = vunpack.c.h.b16 %v1875
    %v2324 = vunpack.c.l.b16 %v1876
    %v2325 = vunpack.c.h.b16 %v1876
    %v2326 = vunpack.c.l.b16 %v1877
    %v2327 = vunpack.c.h.b16 %v1877
    %v2328 = vunpack.c.l.b16 %v1878
    %v2329 = vunpack.c.h.b16 %v1878
    %v2330 = vunpack.c.l.b16 %v1879
    %v2331 = vunpack.c.h.b16 %v1879
    %v2332 = vunpack.c.l.b16 %v1880
    %v2333 = vunpack.c.h.b16 %v1880
    %v2334 = vunpack.c.l.b16 %v1881
    %v2335 = vunpack.c.h.b16 %v1881
    %v2336 = vunpack.c.l.b16 %v1882
    %v2337 = vunpack.c.h.b16 %v1882
    %v2338 = vunpack.c.l.b16 %v1883
    %v2339 = vunpack.c.h.b16 %v1883
    %v2340 = vunpack.c.l.b16 %v1884
    %v2341 = vunpack.c.h.b16 %v1884
    %v2342 = vunpack.c.l.b16 %v1885
    %v2343 = vunpack.c.h.b16 %v1885
    %v2344 = vunpack.c.l.b16 %v1886
    %v2345 = vunpack.c.h.b16 %v1886
    %v2346 = vunpack.c.l.b16 %v1887
    %v2347 = vunpack.c.h.b16 %v1887
    %v2348 = vunpack.c.l.b16 %v1888
    %v2349 = vunpack.c.h.b16 %v1888
    %v2350 = vunpack.c.l.b16 %v1889
    %v2351 = vunpack.c.h.b16 %v1889
    %v2352 = vunpack.c.l.b16 %v1890
    %v2353 = vunpack.c.h.b16 %v1890
    %v2354 = vunpack.c.l.b16 %v1891
    %v2355 = vunpack.c.h.b16 %v1891
    %v2356 = vunpack.c.l.b16 %v1892
    %v2357 = vunpack.c.h.b16 %v1892
    %v2358 = vunpack.c.l.b16 %v1893
    %v2359 = vunpack.c.h.b16 %v1893
    %v2360 = vunpack.c.l.b16 %v1894
    %v2361 = vunpack.c.h.b16 %v1894
    %v2362 = vunpack.c.l.b16 %v1895
    %v2363 = vunpack.c.h.b16 %v1895
    %v2364 = vunpack.c.l.b16 %v1896
    %v2365 = vunpack.c.h.b16 %v1896
    %v2366 = vunpack.c.l.b16 %v1897
    %v2367 = vunpack.c.h.b16 %v1897
    %v2368 = vunpack.c.l.b16 %v1898
    %v2369 = vunpack.c.h.b16 %v1898
    %v2370 = vunpack.c.l.b16 %v1899
    %v2371 = vunpack.c.h.b16 %v1899
    %v2372 = vunpack.c.l.b16 %v1900
    %v2373 = vunpack.c.h.b16 %v1900
    %v2374 = vunpack.c.l.b16 %v1901
    %v2375 = vunpack.c.h.b16 %v1901
    %v2376 = vunpack.c.l.b16 %v1902
    %v2377 = vunpack.c.h.b16 %v1902
    %v2378 = vunpack.c.l.b16 %v1903
    %v2379 = vunpack.c.h.b16 %v1903
    %v2380 = vunpack.c.l.b16 %v1904
    %v2381 = vunpack.c.h.b16 %v1904
    %v2382 = vunpack.c.l.b16 %v1905
    %v2383 = vunpack.c.h.b16 %v1905
    %v2384 = vunpack.c.l.b16 %v1906
    %v2385 = vunpack.c.h.b16 %v1906
    %v2386 = vunpack.c.l.b16 %v1907
    %v2387 = vunpack.c.h.b16 %v1907
    %v2388 = vunpack.c.l.b16 %v1908
    %v2389 = vunpack.c.h.b16 %v1908
    %v2390 = vunpack.c.l.b16 %v1909
    %v2391 = vunpack.c.h.b16 %v1909
    %v2392 = vunpack.c.l.b16 %v1910
    %v2393 = vunpack.c.h.b16 %v1910
    %v2394 = vunpack.c.l.b16 %v1911
    %v2395 = vunpack.c.h.b16 %v1911
    %v2396 = vunpack.c.l.b16 %v1912
    %v2397 = vunpack.c.h.b16 %v1912
    %v2398 = vunpack.c.l.b16 %v1913
    %v2399 = vunpack.c.h.b16 %v1913
    %v2400 = vunpack.c.l.b16 %v1914
    %v2401 = vunpack.c.h.b16 %v1914
    %v2402 = vunpack.c.l.b16 %v1915
    %v2403 = vunpack.c.h.b16 %v1915
    %v2404 = vunpack.c.l.b16 %v1916
    %v2405 = vunpack.c.h.b16 %v1916
    %v2406 = vunpack.c.l.b16 %v1917
    %v2407 = vunpack.c.h.b16 %v1917
    %v2408 = vunpack.c.l.b16 %v1918
    %v2409 = vunpack.c.h.b16 %v1918
    %v2410 = vunpack.c.l.b16 %v1919
    %v2411 = vunpack.c.h.b16 %v1919
    %v2412 = vunpack.c.l.b16 %v1920
    %v2413 = vunpack.c.h.b16 %v1920
    %v2414 = vunpack.c.l.b16 %v1921
    %v2415 = vunpack.c.h.b16 %v1921
    %v2416 = vunpack.c.l.b16 %v1922
    %v2417 = vunpack.c.h.b16 %v1922
    %v2418 = vunpack.c.l.b16 %v1923
    %v2419 = vunpack.c.h.b16 %v1923
    %v2420 = vunpack.c.l.b16 %v1924
    %v2421 = vunpack.c.h.b16 %v1924
    %v2422 = vunpack.c.l.b16 %v1925
    %v2423 = vunpack.c.h.b16 %v1925
    %v2424 = vunpack.c.l.b16 %v1926
    %v2425 = vunpack.c.h.b16 %v1926
    %v2426 = vunpack.c.l.b16 %v1927
    %v2427 = vunpack.c.h.b16 %v1927
    %v2428 = vunpack.c.l.b16 %v1928
    %v2429 = vunpack.c.h.b16 %v1928
    %v2430 = vunpack.c.l.b16 %v1929
    %v2431 = vunpack.c.h.b16 %v1929
    %v2432 = vunpack.c.l.b16 %v1930
    %v2433 = vunpack.c.h.b16 %v1930
    %v2434 = vunpack.c.l.b16 %v1931
    %v2435 = vunpack.c.h.b16 %v1931
    %v2436 = vunpack.c.l.b16 %v1932
    %v2437 = vunpack.c.h.b16 %v1932
    %v2438 = vunpack.c.l.b16 %v1933
    %v2439 = vunpack.c.h.b16 %v1933
    %v2440 = vunpack.c.l.b16 %v1934
    %v2441 = vunpack.c.h.b16 %v1934
    %v2442 = vunpack.c.l.b16 %v1935
    %v2443 = vunpack.c.h.b16 %v1935
    %v2444 = vunpack.c.l.b16 %v1936
    %v2445 = vunpack.c.h.b16 %v1936
    %v2446 = vunpack.c.l.b16 %v1937
    %v2447 = vunpack.c.h.b16 %v1937
    %v2448 = vunpack.c.l.b16 %v1938
    %v2449 = vunpack.c.h.b16 %v1938
    %v2450 = vunpack.c.l.b16 %v1939
    %v2451 = vunpack.c.h.b16 %v1939
    %v2452 = vunpack.c.l.b16 %v1940
    %v2453 = vunpack.c.h.b16 %v1940
    %v2454 = vunpack.c.l.b16 %v1941
    %v2455 = vunpack.c.h.b16 %v1941
    %v2456 = vunpack.c.l.b16 %v1942
    %v2457 = vunpack.c.h.b16 %v1942
    %v2458 = vunpack.c.l.b16 %v1943
    %v2459 = vunpack.c.h.b16 %v1943
    %v2460 = vunpack.c.l.b16 %v1944
    %v2461 = vunpack.c.h.b16 %v1944
    %v2462 = vunpack.c.l.b16 %v1945
    %v2463 = vunpack.c.h.b16 %v1945
    %v2464 = vunpack.c.l.b16 %v1946
    %v2465 = vunpack.c.h.b16 %v1946
    %v2466 = vunpack.c.l.b16 %v1947
    %v2467 = vunpack.c.h.b16 %v1947
    %v2468 = vunpack.c.l.b16 %v1948
    %v2469 = vunpack.c.h.b16 %v1948
    %v2470 = vunpack.c.l.b16 %v1949
    %v2471 = vunpack.c.h.b16 %v1949
    %v2472 = vunpack.c.l.b16 %v1950
    %v2473 = vunpack.c.h.b16 %v1950
    %v2474 = vunpack.c.l.b16 %v1951
    %v2475 = vunpack.c.h.b16 %v1951
    %v2476 = vunpack.c.l.b16 %v1952
    %v2477 = vunpack.c.h.b16 %v1952
    %v2478 = vunpack.c.l.b16 %v1953
    %v2479 = vunpack.c.h.b16 %v1953
    %v2480 = vunpack.c.l.b16 %v1954
    %v2481 = vunpack.c.h.b16 %v1954
    %v2482 = vunpack.c.l.b16 %v1955
    %v2483 = vunpack.c.h.b16 %v1955
    %v2484 = vunpack.c.l.b16 %v1956
    %v2485 = vunpack.c.h.b16 %v1956
    %v2486 = vunpack.c.l.b16 %v1957
    %v2487 = vunpack.c.h.b16 %v1957
    %v2488 = vunpack.c.l.b16 %v1958
    %v2489 = vunpack.c.h.b16 %v1958
    %v2490 = vunpack.c.l.b16 %v1959
    %v2491 = vunpack.c.h.b16 %v1959
    %v2492 = vunpack.c.l.b16 %v1960
    %v2493 = vunpack.c.h.b16 %v1960
    %v2494 = vunpack.c.l.b16 %v1961
    %v2495 = vunpack.c.h.b16 %v1961
    %v2496 = vunpack.c.l.b16 %v1962
    %v2497 = vunpack.c.h.b16 %v1962
    %v2498 = vunpack.c.l.b16 %v1963
    %v2499 = vunpack.c.h.b16 %v1963
    %v2500 = vunpack.c.l.b16 %v1964
    %v2501 = vunpack.c.h.b16 %v1964
    %v2502 = vunpack.c.l.b16 %v1965
    %v2503 = vunpack.c.h.b16 %v1965
    %v2504 = vunpack.c.l.b16 %v1966
    %v2505 = vunpack.c.h.b16 %v1966
    %v2506 = vunpack.c.l.b16 %v1967
    %v2507 = vunpack.c.h.b16 %v1967
    %v2508 = vunpack.c.l.b16 %v1968
    %v2509 = vunpack.c.h.b16 %v1968
    %v2510 = vunpack.c.l.b16 %v1969
    %v2511 = vunpack.c.h.b16 %v1969
    %v2512 = vunpack.c.l.b16 %v1970
    %v2513 = vunpack.c.h.b16 %v1970
    %v2514 = vunpack.c.l.b16 %v1971
    %v2515 = vunpack.c.h.b16 %v1971
    %v2516 = vunpack.c.l.b16 %v1972
    %v2517 = vunpack.c.h.b16 %v1972
    %v2518 = vunpack.c.l.b16 %v1973
    %v2519 = vunpack.c.h.b16 %v1973
    %v2520 = vunpack.c.l.b16 %v1974
    %v2521 = vunpack.c.h.b16 %v1974
    %v2522 = vunpack.c.l.b16 %v1975
    %v2523 = vunpack.c.h.b16 %v1975
    %v2524 = vunpack.c.l.b16 %v1976
    %v2525 = vunpack.c.h.b16 %v1976
    %v2526 = vunpack.c.l.b16 %v1977
    %v2527 = vunpack.c.h.b16 %v1977
    %v2528 = vunpack.c.l.b16 %v1978
    %v2529 = vunpack.c.h.b16 %v1978
    %v2530 = vunpack.c.l.b16 %v1979
    %v2531 = vunpack.c.h.b16 %v1979
    %v2532 = vunpack.c.l.b16 %v1980
    %v2533 = vunpack.c.h.b16 %v1980
    %v2534 = vunpack.c.l.b16 %v1981
    %v2535 = vunpack.c.h.b16 %v1981
    %v2536 = vunpack.c.l.b16 %v1982
    %v2537 = vunpack.c.h.b16 %v1982
    %v2538 = vunpack.c.l.b16 %v1983
    %v2539 = vunpack.c.h.b16 %v1983
    %v2540 = vunpack.c.l.b16 %v1984
    %v2541 = vunpack.c.h.b16 %v1984
    %v2542 = vunpack.c.l.b16 %v1985
    %v2543 = vunpack.c.h.b16 %v1985
    %v2544 = vunpack.c.l.b16 %v1986
    %v2545 = vunpack.c.h.b16 %v1986
    %v2546 = vunpack.c.l.b16 %v1987
    %v2547 = vunpack.c.h.b16 %v1987
    %v2548 = vunpack.c.l.b16 %v1988
    %v2549 = vunpack.c.h.b16 %v1988
    %v2550 = vunpack.c.l.b16 %v1989
    %v2551 = vunpack.c.h.b16 %v1989
    %v2552 = vunpack.c.l.b16 %v1990
    %v2553 = vunpack.c.h.b16 %v1990
    %v2554 = vunpack.c.l.b16 %v1991
    %v2555 = vunpack.c.h.b16 %v1991
    %v2556 = vunpack.c.l.b16 %v1992
    %v2557 = vunpack.c.h.b16 %v1992
    %v2558 = vunpack.c.l.b16 %v1993
    %v2559 = vunpack.c.h.b16 %v1993
    %v2560 = vunpack.c.l.b16 %v1994
    %v2561 = vunpack.c.h.b16 %v1994
    %v2562 = vunpack.c.l.b16 %v1995
    %v2563 = vunpack.c.h.b16 %v1995
    %v2564 = vunpack.c.l.b16 %v1996
    %v2565 = vunpack.c.h.b16 %v1996
    %v2566 = vunpack.c.l.b16 %v1997
    %v2567 = vunpack.c.h.b16 %v1997
    %v2568 = vunpack.c.l.b16 %v1998
    %v2569 = vunpack.c.h.b16 %v1998
    %v2570 = vunpack.c.l.b16 %v1999
    %v2571 = vunpack.c.h.b16 %v1999
    %v2572 = vunpack.c.l.b16 %v2000
    %v2573 = vunpack.c.h.b16 %v2000
    %v2574 = vunpack.c.l.b16 %v2001
    %v2575 = vunpack.c.h.b16 %v2001
    %v2576 = vunpack.c.l.b16 %v2002
    %v2577 = vunpack.c.h.b16 %v2002
    %v2578 = vunpack.c.l.b16 %v2003
    %v2579 = vunpack.c.h.b16 %v2003
    %v2580 = vunpack.c.l.b16 %v2004
    %v2581 = vunpack.c.h.b16 %v2004
    %v2582 = vunpack.c.l.b16 %v2005
    %v2583 = vunpack.c.h.b16 %v2005
    %v2584 = vunpack.c.l.b16 %v2006
    %v2585 = vunpack.c.h.b16 %v2006
    %v2586 = vunpack.c.l.b16 %v2007
    %v2587 = vunpack.c.h.b16 %v2007
    %v2588 = vunpack.c.l.b16 %v2008
    %v2589 = vunpack.c.h.b16 %v2008
    %v2590 = vunpack.c.l.b16 %v2009
    %v2591 = vunpack.c.h.b16 %v2009
    %v2592 = vunpack.c.l.b16 %v2010
    %v2593 = vunpack.c.h.b16 %v2010
    %v2594 = vunpack.c.l.b16 %v2011
    %v2595 = vunpack.c.h.b16 %v2011
    %v2596 = vunpack.c.l.b16 %v2012
    %v2597 = vunpack.c.h.b16 %v2012
    %v2598 = vunpack.c.l.b16 %v2013
    %v2599 = vunpack.c.h.b16 %v2013
    %v2600 = vunpack.c.l.b16 %v2014
    %v2601 = vunpack.c.h.b16 %v2014
    %v2602 = vunpack.c.l.b16 %v2015
    %v2603 = vunpack.c.h.b16 %v2015
    %v2604 = vunpack.c.l.b16 %v2016
    %v2605 = vunpack.c.h.b16 %v2016
    %v2606 = vunpack.c.l.b16 %v2017
    %v2607 = vunpack.c.h.b16 %v2017
    %v2608 = vunpack.c.l.b16 %v2018
    %v2609 = vunpack.c.h.b16 %v2018
    %v2610 = vunpack.c.l.b16 %v2019
    %v2611 = vunpack.c.h.b16 %v2019
    %v2612 = vunpack.c.l.b16 %v2020
    %v2613 = vunpack.c.h.b16 %v2020
    %v2614 = vunpack.c.l.b16 %v2021
    %v2615 = vunpack.c.h.b16 %v2021
    %v2616 = vunpack.c.l.b16 %v2022
    %v2617 = vunpack.c.h.b16 %v2022
    %v2618 = vunpack.c.l.b16 %v2023
    %v2619 = vunpack.c.h.b16 %v2023
    %v2620 = vunpack.c.l.b16 %v2024
    %v2621 = vunpack.c.h.b16 %v2024
    %v2622 = vunpack.c.l.b16 %v2025
    %v2623 = vunpack.c.h.b16 %v2025
    %v2624 = vunpack.c.l.b16 %v2026
    %v2625 = vunpack.c.h.b16 %v2026
    %v2626 = vunpack.c.l.b16 %v2027
    %v2627 = vunpack.c.h.b16 %v2027
    %v2628 = vunpack.c.l.b16 %v2028
    %v2629 = vunpack.c.h.b16 %v2028
    %v2630 = vunpack.c.l.b16 %v2029
    %v2631 = vunpack.c.h.b16 %v2029
    %v2632 = vunpack.c.l.b16 %v2030
    %v2633 = vunpack.c.h.b16 %v2030
    %v2634 = vunpack.c.l.b16 %v2031
    %v2635 = vunpack.c.h.b16 %v2031
    %v2636 = vunpack.c.l.b16 %v2032
    %v2637 = vunpack.c.h.b16 %v2032
    %v2638 = vunpack.c.l.b16 %v2033
    %v2639 = vunpack.c.h.b16 %v2033
    %v2640 = vunpack.c.l.b16 %v2034
    %v2641 = vunpack.c.h.b16 %v2034
    %v2642 = vunpack.c.l.b16 %v2035
    %v2643 = vunpack.c.h.b16 %v2035
    %v2644 = vpack.c.b16 %v2266, %v2260
    %v2645 = vpack.c.b16 %v2267, %v2261
    %v2646 = vpack.c.b16 %v2268, %v2262
    %v2647 = vpack.c.b16 %v2269, %v2263
    %v2648 = vpack.c.b16 %v2270, %v2264
    %v2649 = vpack.c.b16 %v2271, %v2265
    %v2650 = vpack.c.b16 %v2278, %v2272
    %v2651 = vpack.c.b16 %v2279, %v2273
    %v2652 = vpack.c.b16 %v2280, %v2274
    %v2653 = vpack.c.b16 %v2281, %v2275
    %v2654 = vpack.c.b16 %v2282, %v2276
    %v2655 = vpack.c.b16 %v2283, %v2277
    %v2656 = vpack.c.b16 %v2290, %v2284
    %v2657 = vpack.c.b16 %v2291, %v2285
    %v2658 = vpack.c.b16 %v2292, %v2286
    %v2659 = vpack.c.b16 %v2293, %v2287
    %v2660 = vpack.c.b16 %v2294, %v2288
    %v2661 = vpack.c.b16 %v2295, %v2289
    %v2662 = vpack.c.b16 %v2302, %v2296
    %v2663 = vpack.c.b16 %v2303, %v2297
    %v2664 = vpack.c.b16 %v2304, %v2298
    %v2665 = vpack.c.b16 %v2305, %v2299
    %v2666 = vpack.c.b16 %v2306, %v2300
    %v2667 = vpack.c.b16 %v2307, %v2301
    %v2668 = vpack.c.b16 %v2314, %v2308
    %v2669 = vpack.c.b16 %v2315, %v2309
    %v2670 = vpack.c.b16 %v2316, %v2310
    %v2671 = vpack.c.b16 %v2317, %v2311
    %v2672 = vpack.c.b16 %v2318, %v2312
    %v2673 = vpack.c.b16 %v2319, %v2313
    %v2674 = vpack.c.b16 %v2326, %v2320
    %v2675 = vpack.c.b16 %v2327, %v2321
    %v2676 = vpack.c.b16 %v2328, %v2322
    %v2677 = vpack.c.b16 %v2329, %v2323
    %v2678 = vpack.c.b16 %v2330, %v2324
    %v2679 = vpack.c.b16 %v2331, %v2325
    %v2680 = vpack.c.b16 %v2338, %v2332
    %v2681 = vpack.c.b16 %v2339, %v2333
    %v2682 = vpack.c.b16 %v2340, %v2334
    %v2683 = vpack.c.b16 %v2341, %v2335
    %v2684 = vpack.c.b16 %v2342, %v2336
    %v2685 = vpack.c.b16 %v2343, %v2337
    %v2686 = vpack.c.b16 %v2350, %v2344
    %v2687 = vpack.c.b16 %v2351, %v2345
    %v2688 = vpack.c.b16 %v2352, %v2346
    %v2689 = vpack.c.b16 %v2353, %v2347
    %v2690 = vpack.c.b16 %v2354, %v2348
    %v2691 = vpack.c.b16 %v2355, %v2349
    %v2692 = vpack.c.b16 %v2362, %v2356
    %v2693 = vpack.c.b16 %v2363, %v2357
    %v2694 = vpack.c.b16 %v2364, %v2358
    %v2695 = vpack.c.b16 %v2365, %v2359
    %v2696 = vpack.c.b16 %v2366, %v2360
    %v2697 = vpack.c.b16 %v2367, %v2361
    %v2698 = vpack.c.b16 %v2374, %v2368
    %v2699 = vpack.c.b16 %v2375, %v2369
    %v2700 = vpack.c.b16 %v2376, %v2370
    %v2701 = vpack.c.b16 %v2377, %v2371
    %v2702 = vpack.c.b16 %v2378, %v2372
    %v2703 = vpack.c.b16 %v2379, %v2373
    %v2704 = vpack.c.b16 %v2386, %v2380
    %v2705 = vpack.c.b16 %v2387, %v2381
    %v2706 = vpack.c.b16 %v2388, %v2382
    %v2707 = vpack.c.b16 %v2389, %v2383
    %v2708 = vpack.c.b16 %v2390, %v2384
    %v2709 = vpack.c.b16 %v2391, %v2385
    %v2710 = vpack.c.b16 %v2398, %v2392
    %v2711 = vpack.c.b16 %v2399, %v2393
    %v2712 = vpack.c.b16 %v2400, %v2394
    %v2713 = vpack.c.b16 %v2401, %v2395
    %v2714 = vpack.c.b16 %v2402, %v2396
    %v2715 = vpack.c.b16 %v2403, %v2397
    %v2716 = vpack.c.b16 %v2410, %v2404
    %v2717 = vpack.c.b16 %v2411, %v2405
    %v2718 = vpack.c.b16 %v2412, %v2406
    %v2719 = vpack.c.b16 %v2413, %v2407
    %v2720 = vpack.c.b16 %v2414, %v2408
    %v2721 = vpack.c.b16 %v2415, %v2409
    %v2722 = vpack.c.b16 %v2422, %v2416
    %v2723 = vpack.c.b16 %v2423, %v2417
    %v2724 = vpack.c.b16 %v2424, %v2418
    %v2725 = vpack.c.b16 %v2425, %v2419
    %v2726 = vpack.c.b16 %v2426, %v2420
    %v2727 = vpack.c.b16 %v2427, %v2421
    %v2728 = vpack.c.b16 %v2434, %v2428
    %v2729 = vpack.c.b16 %v2435, %v2429
    %v2730 = vpack.c.b16 %v2436, %v2430
    %v2731 = vpack.c.b16 %v2437, %v2431
    %v2732 = vpack.c.b16 %v2438, %v2432
    %v2733 = vpack.c.b16 %v2439, %v2433
    %v2734 = vpack.c.b16 %v2446, %v2440
    %v2735 = vpack.c.b16 %v2447, %v2441
    %v2736 = vpack.c.b16 %v2448, %v2442
    %v2737 = vpack.c.b16 %v2449, %v2443
    %v2738 = vpack.c.b16 %v2450, %v2444
    %v2739 = vpack.c.b16 %v2451, %v2445
    %v2740 = vpack.c.b16 %v2458, %v2452
    %v2741 = vpack.c.b16 %v2459, %v2453
    %v2742 = vpack.c.b16 %v2460, %v2454
    %v2743 = vpack.c.b16 %v2461, %v2455
    %v2744 = vpack.c.b16 %v2462, %v2456
    %v2745 = vpack.c.b16 %v2463, %v2457
    %v2746 = vpack.c.b16 %v2470, %v2464
    %v2747 = vpack.c.b16 %v2471, %v2465
    %v2748 = vpack.c.b16 %v2472, %v2466
    %v2749 = vpack.c.b16 %v2473, %v2467
    %v2750 = vpack.c.b16 %v2474, %v2468
    %v2751 = vpack.c.b16 %v2475, %v2469
    %v2752 = vpack.c.b16 %v2482, %v2476
    %v2753 = vpack.c.b16 %v2483, %v2477
    %v2754 = vpack.c.b16 %v2484, %v2478
    %v2755 = vpack.c.b16 %v2485, %v2479
    %v2756 = vpack.c.b16 %v2486, %v2480
    %v2757 = vpack.c.b16 %v2487, %v2481
    %v2758 = vpack.c.b16 %v2494, %v2488
    %v2759 = vpack.c.b16 %v2495, %v2489
    %v2760 = vpack.c.b16 %v2496, %v2490
    %v2761 = vpack.c.b16 %v2497, %v2491
    %v2762 = vpack.c.b16 %v2498, %v2492
    %v2763 = vpack.c.b16 %v2499, %v2493
    %v2764 = vpack.c.b16 %v2506, %v2500
    %v2765 = vpack.c.b16 %v2507, %v2501
    %v2766 = vpack.c.b16 %v2508, %v2502
    %v2767 = vpack.c.b16 %v2509, %v2503
    %v2768 = vpack.c.b16 %v2510, %v2504
    %v2769 = vpack.c.b16 %v2511, %v2505
    %v2770 = vpack.c.b16 %v2518, %v2512
    %v2771 = vpack.c.b16 %v2519, %v2513
    %v2772 = vpack.c.b16 %v2520, %v2514
    %v2773 = vpack.c.b16 %v2521, %v2515
    %v2774 = vpack.c.b16 %v2522, %v2516
    %v2775 = vpack.c.b16 %v2523, %v2517
    %v2776 = vpack.c.b16 %v2530, %v2524
    %v2777 = vpack.c.b16 %v2531, %v2525
    %v2778 = vpack.c.b16 %v2532, %v2526
    %v2779 = vpack.c.b16 %v2533, %v2527
    %v2780 = vpack.c.b16 %v2534, %v2528
    %v2781 = vpack.c.b16 %v2535, %v2529
    %v2782 = vpack.c.b16 %v2542, %v2536
    %v2783 = vpack.c.b16 %v2543, %v2537
    %v2784 = vpack.c.b16 %v2544, %v2538
    %v2785 = vpack.c.b16 %v2545, %v2539
    %v2786 = vpack.c.b16 %v2546, %v2540
    %v2787 = vpack.c.b16 %v2547, %v2541
    %v2788 = vpack.c.b16 %v2554, %v2548
    %v2789 = vpack.c.b16 %v2555, %v2549
    %v2790 = vpack.c.b16 %v2556, %v2550
    %v2791 = vpack.c.b16 %v2557, %v2551
    %v2792 = vpack.c.b16 %v2558, %v2552
    %v2793 = vpack.c.b16 %v2559, %v2553
    %v2794 = vpack.c.b16 %v2566, %v2560
    %v2795 = vpack.c.b16 %v2567, %v2561
    %v2796 = vpack.c.b16 %v2568, %v2562
    %v2797 = vpack.c.b16 %v2569, %v2563
    %v2798 = vpack.c.b16 %v2570, %v2564
    %v2799 = vpack.c.b16 %v2571, %v2565
    %v2800 = vpack.c.b16 %v2578, %v2572
    %v2801 = vpack.c.b16 %v2579, %v2573
    %v2802 = vpack.c.b16 %v2580, %v2574
    %v2803 = vpack.c.b16 %v2581, %v2575
    %v2804 = vpack.c.b16 %v2582, %v2576
    %v2805 = vpack.c.b16 %v2583, %v2577
    %v2806 = vpack.c.b16 %v2590, %v2584
    %v2807 = vpack.c.b16 %v2591, %v2585
    %v2808 = vpack.c.b16 %v2592, %v2586
    %v2809 = vpack.c.b16 %v2593, %v2587
    %v2810 = vpack.c.b16 %v2594, %v2588
    %v2811 = vpack.c.b16 %v2595, %v2589
    %v2812 = vpack.c.b16 %v2602, %v2596
    %v2813 = vpack.c.b16 %v2603, %v2597
    %v2814 = vpack.c.b16 %v2604, %v2598
    %v2815 = vpack.c.b16 %v2605, %v2599
    %v2816 = vpack.c.b16 %v2606, %v2600
    %v2817 = vpack.c.b16 %v2607, %v2601
    %v2818 = vpack.c.b16 %v2614, %v2608
    %v2819 = vpack.c.b16 %v2615, %v2609
    %v2820 = vpack.c.b16 %v2616, %v2610
    %v2821 = vpack.c.b16 %v2617, %v2611
    %v2822 = vpack.c.b16 %v2618, %v2612
    %v2823 = vpack.c.b16 %v2619, %v2613
    %v2824 = vpack.c.b16 %v2626, %v2620
    %v2825 = vpack.c.b16 %v2627, %v2621
    %v2826 = vpack.c.b16 %v2628, %v2622
    %v2827 = vpack.c.b16 %v2629, %v2623
    %v2828 = vpack.c.b16 %v2630, %v2624
    %v2829 = vpack.c.b16 %v2631, %v2625
    %v2830 = vpack.c.b16 %v2638, %v2632
    %v2831 = vpack.c.b16 %v2639, %v2633
    %v2832 = vpack.c.b16 %v2640, %v2634
    %v2833 = vpack.c.b16 %v2641, %v2635
    %v2834 = vpack.c.b16 %v2642, %v2636
    %v2835 = vpack.c.b16 %v2643, %v2637
    %3028 = vmatprep.subr.bf16.mxu0 %v2645
    %3029 = vmatpush1.bf16.msra.mxu0 %v2644
    %3030 = vmatprep.subr.bf16.mxu0 %v2651
    %3031 = vmatpush1.bf16.msra.mxu0 %v2650
    %3032 = vmatprep.subr.bf16.mxu0 %v2657
    %3033 = vmatpush1.bf16.msra.mxu0 %v2656
    %3034 = vmatprep.subr.bf16.mxu0 %v2663
    %3035 = vmatpush1.bf16.msra.mxu0 %v2662
    %3036 = vmatprep.subr.bf16.mxu0 %v2669
    %3037 = vmatpush1.bf16.msra.mxu0 %v2668
    %3038 = vmatprep.subr.bf16.mxu0 %v2675
    %3039 = vmatpush1.bf16.msra.mxu0 %v2674
    %3040 = vmatprep.subr.bf16.mxu0 %v2681
    %3041 = vmatpush1.bf16.msra.mxu0 %v2680
    %3042 = vmatprep.subr.bf16.mxu0 %v2687
    %3043 = vmatpush1.bf16.msra.mxu0 %v2686
    %3044 = vmatprep.subr.bf16.mxu0 %v2693
    %3045 = vmatpush1.bf16.msra.mxu0 %v2692
    %3046 = vmatprep.subr.bf16.mxu0 %v2699
    %3047 = vmatpush1.bf16.msra.mxu0 %v2698
    %3048 = vmatprep.subr.bf16.mxu0 %v2705
    %3049 = vmatpush1.bf16.msra.mxu0 %v2704
    %3050 = vmatprep.subr.bf16.mxu0 %v2711
    %3051 = vmatpush1.bf16.msra.mxu0 %v2710
    %3052 = vmatprep.subr.bf16.mxu0 %v2717
    %3053 = vmatpush1.bf16.msra.mxu0 %v2716
    %3054 = vmatprep.subr.bf16.mxu0 %v2723
    %3055 = vmatpush1.bf16.msra.mxu0 %v2722
    %3056 = vmatprep.subr.bf16.mxu0 %v2729
    %3057 = vmatpush1.bf16.msra.mxu0 %v2728
    %3058 = vmatprep.subr.bf16.mxu0 %v2735
    %3059 = vmatpush1.bf16.msra.mxu0 %v2734
    %3060 = vmatprep.mubr.bf16.mxu0 %v1837
    %3061 = vmatmul.mubr.bf16.gmra.mrb[0].mxu0 %v1836
    %v3062 = vpop.f32.mrb[0].mxu0
    %v3063 = vadd.f32 %v2041, %v3062
    %v3064 = vpop.f32.mrb[0].mxu0
    %v3065 = vadd.f32 %v2045, %v3064
    %v3066 = vpop.f32.mrb[0].mxu0
    %v3067 = vadd.f32 %v2041, %v3066
    %v3068 = vpop.f32.mrb[0].mxu0
    %v3069 = vadd.f32 %v2045, %v3068
    %3070 = vmatprep.mubr.bf16.mxu0 %v1841
    %3071 = vmatmul.mubr.bf16.gmra.mrb[0].mxu0 %v1840
    %v3072 = vpop.f32.mrb[0].mxu0
    %v3073 = vadd.f32 %v2041, %v3072
    %v3074 = vpop.f32.mrb[0].mxu0
    %v3075 = vadd.f32 %v2045, %v3074
    %v3076 = vpop.f32.mrb[0].mxu0
    %v3077 = vadd.f32 %v2041, %v3076
    %v3078 = vpop.f32.mrb[0].mxu0
    %v3079 = vadd.f32 %v2045, %v3078
    %3080 = vdwg.mxu0
    %3081 = vmatprep.subr.bf16.mxu0 %v2741
    %3082 = vmatpush1.bf16.msra.mxu0 %v2740
    %3083 = vmatprep.subr.bf16.mxu0 %v2747
    %3084 = vmatpush1.bf16.msra.mxu0 %v2746
    %3085 = vmatprep.subr.bf16.mxu0 %v2753
    %3086 = vmatpush1.bf16.msra.mxu0 %v2752
    %3087 = vmatprep.subr.bf16.mxu0 %v2759
    %3088 = vmatpush1.bf16.msra.mxu0 %v2758
    %3089 = vmatprep.subr.bf16.mxu0 %v2765
    %3090 = vmatpush1.bf16.msra.mxu0 %v2764
    %3091 = vmatprep.subr.bf16.mxu0 %v2771
    %3092 = vmatpush1.bf16.msra.mxu0 %v2770
    %3093 = vmatprep.subr.bf16.mxu0 %v2777
    %3094 = vmatpush1.bf16.msra.mxu0 %v2776
    %3095 = vmatprep.subr.bf16.mxu0 %v2783
    %3096 = vmatpush1.bf16.msra.mxu0 %v2782
    %3097 = vmatprep.subr.bf16.mxu0 %v2789
    %3098 = vmatpush1.bf16.msra.mxu0 %v2788
    %3099 = vmatprep.subr.bf16.mxu0 %v2795
    %3100 = vmatpush1.bf16.msra.mxu0 %v2794
    %3101 = vmatprep.subr.bf16.mxu0 %v2801
    %3102 = vmatpush1.bf16.msra.mxu0 %v2800
    %3103 = vmatprep.subr.bf16.mxu0 %v2807
    %3104 = vmatpush1.bf16.msra.mxu0 %v2806
    %3105 = vmatprep.subr.bf16.mxu0 %v2813
    %3106 = vmatpush1.bf16.msra.mxu0 %v2812
    %3107 = vmatprep.subr.bf16.mxu0 %v2819
    %3108 = vmatpush1.bf16.msra.mxu0 %v2818
    %3109 = vmatprep.subr.bf16.mxu0 %v2825
    %3110 = vmatpush1.bf16.msra.mxu0 %v2824
    %3111 = vmatprep.subr.bf16.mxu0 %v2831
    %3112 = vmatpush1.bf16.msra.mxu0 %v2830
    %3113 = vmatprep.mubr.bf16.mxu0 %v1839
    %3114 = vmatmul.mubr.bf16.gmra.mrb[0].mxu0 %v1838
    %v3115 = vpop.f32.mrb[0].mxu0
    %v3116 = vadd.f32 %v3063, %v3115
    %v3117 = vpop.f32.mrb[0].mxu0
    %v3118 = vadd.f32 %v3065, %v3117
    %v3119 = vpop.f32.mrb[0].mxu0
    %v3120 = vadd.f32 %v3067, %v3119
    %v3121 = vpop.f32.mrb[0].mxu0
    %v3122 = vadd.f32 %v3069, %v3121
    %3123 = vmatprep.mubr.bf16.mxu0 %v1843
    %3124 = vmatmul.mubr.bf16.gmra.mrb[0].mxu0 %v1842
    %v3125 = vpop.f32.mrb[0].mxu0
    %v3126 = vadd.f32 %v3073, %v3125
    %v3127 = vpop.f32.mrb[0].mxu0
    %v3128 = vadd.f32 %v3075, %v3127
    %v3129 = vpop.f32.mrb[0].mxu0
    %v3130 = vadd.f32 %v3077, %v3129
    %v3131 = vpop.f32.mrb[0].mxu0
    %v3132 = vadd.f32 %v3079, %v3131
    %3133 = vdwg.mxu0
    %3134 = vmatprep.subr.bf16.mxu0 %v2647
    %3135 = vmatpush1.bf16.msra.mxu0 %v2646
    %3136 = vmatprep.subr.bf16.mxu0 %v2653
    %3137 = vmatpush1.bf16.msra.mxu0 %v2652
    %3138 = vmatprep.subr.bf16.mxu0 %v2659
    %3139 = vmatpush1.bf16.msra.mxu0 %v2658
    %3140 = vmatprep.subr.bf16.mxu0 %v2665
    %3141 = vmatpush1.bf16.msra.mxu0 %v2664
    %3142 = vmatprep.subr.bf16.mxu0 %v2671
    %3143 = vmatpush1.bf16.msra.mxu0 %v2670
    %3144 = vmatprep.subr.bf16.mxu0 %v2677
    %3145 = vmatpush1.bf16.msra.mxu0 %v2676
    %3146 = vmatprep.subr.bf16.mxu0 %v2683
    %3147 = vmatpush1.bf16.msra.mxu0 %v2682
    %3148 = vmatprep.subr.bf16.mxu0 %v2689
    %3149 = vmatpush1.bf16.msra.mxu0 %v2688
    %3150 = vmatprep.subr.bf16.mxu0 %v2695
    %3151 = vmatpush1.bf16.msra.mxu0 %v2694
    %3152 = vmatprep.subr.bf16.mxu0 %v2701
    %3153 = vmatpush1.bf16.msra.mxu0 %v2700
    %3154 = vmatprep.subr.bf16.mxu0 %v2707
    %3155 = vmatpush1.bf16.msra.mxu0 %v2706
    %3156 = vmatprep.subr.bf16.mxu0 %v2713
    %3157 = vmatpush1.bf16.msra.mxu0 %v2712
    %3158 = vmatprep.subr.bf16.mxu0 %v2719
    %3159 = vmatpush1.bf16.msra.mxu0 %v2718
    %3160 = vmatprep.subr.bf16.mxu0 %v2725
    %3161 = vmatpush1.bf16.msra.mxu0 %v2724
    %3162 = vmatprep.subr.bf16.mxu0 %v2731
    %3163 = vmatpush1.bf16.msra.mxu0 %v2730
    %3164 = vmatprep.subr.bf16.mxu0 %v2737
    %3165 = vmatpush1.bf16.msra.mxu0 %v2736
    %3166 = vmatprep.mubr.bf16.mxu0 %v1837
    %3167 = vmatmul.mubr.bf16.gmra.mrb[0].mxu0 %v1836
    %v3168 = vpop.f32.mrb[0].mxu0
    %v3169 = vadd.f32 %v2049, %v3168
    %v3170 = vpop.f32.mrb[0].mxu0
    %v3171 = vadd.f32 %v2053, %v3170
    %v3172 = vpop.f32.mrb[0].mxu0
    %v3173 = vadd.f32 %v2049, %v3172
    %v3174 = vpop.f32.mrb[0].mxu0
    %v3175 = vadd.f32 %v2053, %v3174
    %3176 = vmatprep.mubr.bf16.mxu0 %v1841
    %3177 = vmatmul.mubr.bf16.gmra.mrb[0].mxu0 %v1840
    %v3178 = vpop.f32.mrb[0].mxu0
    %v3179 = vadd.f32 %v2049, %v3178
    %v3180 = vpop.f32.mrb[0].mxu0
    %v3181 = vadd.f32 %v2053, %v3180
    %v3182 = vpop.f32.mrb[0].mxu0
    %v3183 = vadd.f32 %v2049, %v3182
    %v3184 = vpop.f32.mrb[0].mxu0
    %v3185 = vadd.f32 %v2053, %v3184
    %3186 = vdwg.mxu0
    %3187 = vmatprep.subr.bf16.mxu0 %v2743
    %3188 = vmatpush1.bf16.msra.mxu0 %v2742
    %3189 = vmatprep.subr.bf16.mxu0 %v2749
    %3190 = vmatpush1.bf16.msra.mxu0 %v2748
    %3191 = vmatprep.subr.bf16.mxu0 %v2755
    %3192 = vmatpush1.bf16.msra.mxu0 %v2754
    %3193 = vmatprep.subr.bf16.mxu0 %v2761
    %3194 = vmatpush1.bf16.msra.mxu0 %v2760
    %3195 = vmatprep.subr.bf16.mxu0 %v2767
    %3196 = vmatpush1.bf16.msra.mxu0 %v2766
    %3197 = vmatprep.subr.bf16.mxu0 %v2773
    %3198 = vmatpush1.bf16.msra.mxu0 %v2772
    %3199 = vmatprep.subr.bf16.mxu0 %v2779
    %3200 = vmatpush1.bf16.msra.mxu0 %v2778
    %3201 = vmatprep.subr.bf16.mxu0 %v2785
    %3202 = vmatpush1.bf16.msra.mxu0 %v2784
    %3203 = vmatprep.subr.bf16.mxu0 %v2791
    %3204 = vmatpush1.bf16.msra.mxu0 %v2790
    %3205 = vmatprep.subr.bf16.mxu0 %v2797
    %3206 = vmatpush1.bf16.msra.mxu0 %v2796
    %3207 = vmatprep.subr.bf16.mxu0 %v2803
    %3208 = vmatpush1.bf16.msra.mxu0 %v2802
    %3209 = vmatprep.subr.bf16.mxu0 %v2809
    %3210 = vmatpush1.bf16.msra.mxu0 %v2808
    %3211 = vmatprep.subr.bf16.mxu0 %v2815
    %3212 = vmatpush1.bf16.msra.mxu0 %v2814
    %3213 = vmatprep.subr.bf16.mxu0 %v2821
    %3214 = vmatpush1.bf16.msra.mxu0 %v2820
    %3215 = vmatprep.subr.bf16.mxu0 %v2827
    %3216 = vmatpush1.bf16.msra.mxu0 %v2826
    %3217 = vmatprep.subr.bf16.mxu0 %v2833
    %3218 = vmatpush1.bf16.msra.mxu0 %v2832
    %3219 = vmatprep.mubr.bf16.mxu0 %v1839
    %3220 = vmatmul.mubr.bf16.gmra.mrb[0].mxu0 %v1838
    %v3221 = vpop.f32.mrb[0].mxu0
    %v3222 = vadd.f32 %v3169, %v3221
    %v3223 = vpop.f32.mrb[0].mxu0
    %v3224 = vadd.f32 %v3171, %v3223
    %v3225 = vpop.f32.mrb[0].mxu0
    %v3226 = vadd.f32 %v3173, %v3225
    %v3227 = vpop.f32.mrb[0].mxu0
    %v3228 = vadd.f32 %v3175, %v3227
    %3229 = vmatprep.mubr.bf16.mxu0 %v1843
    %3230 = vmatmul.mubr.bf16.gmra.mrb[0].mxu0 %v1842
    %v3231 = vpop.f32.mrb[0].mxu0
    %v3232 = vadd.f32 %v3179, %v3231
    %v3233 = vpop.f32.mrb[0].mxu0
    %v3234 = vadd.f32 %v3181, %v3233
    %v3235 = vpop.f32.mrb[0].mxu0
    %v3236 = vadd.f32 %v3183, %v3235
    %v3237 = vpop.f32.mrb[0].mxu0
    %v3238 = vadd.f32 %v3185, %v3237
    %3239 = vdwg.mxu0
    %3240 = vmatprep.subr.bf16.mxu0 %v2649
    %3241 = vmatpush1.bf16.msra.mxu0 %v2648
    %3242 = vmatprep.subr.bf16.mxu0 %v2655
    %3243 = vmatpush1.bf16.msra.mxu0 %v2654
    %3244 = vmatprep.subr.bf16.mxu0 %v2661
    %3245 = vmatpush1.bf16.msra.mxu0 %v2660
    %3246 = vmatprep.subr.bf16.mxu0 %v2667
    %3247 = vmatpush1.bf16.msra.mxu0 %v2666
    %3248 = vmatprep.subr.bf16.mxu0 %v2673
    %3249 = vmatpush1.bf16.msra.mxu0 %v2672
    %3250 = vmatprep.subr.bf16.mxu0 %v2679
    %3251 = vmatpush1.bf16.msra.mxu0 %v2678
    %3252 = vmatprep.subr.bf16.mxu0 %v2685
    %3253 = vmatpush1.bf16.msra.mxu0 %v2684
    %3254 = vmatprep.subr.bf16.mxu0 %v2691
    %3255 = vmatpush1.bf16.msra.mxu0 %v2690
    %3256 = vmatprep.subr.bf16.mxu0 %v2697
    %3257 = vmatpush1.bf16.msra.mxu0 %v2696
    %3258 = vmatprep.subr.bf16.mxu0 %v2703
    %3259 = vmatpush1.bf16.msra.mxu0 %v2702
    %3260 = vmatprep.subr.bf16.mxu0 %v2709
    %3261 = vmatpush1.bf16.msra.mxu0 %v2708
    %3262 = vmatprep.subr.bf16.mxu0 %v2715
    %3263 = vmatpush1.bf16.msra.mxu0 %v2714
    %3264 = vmatprep.subr.bf16.mxu0 %v2721
    %3265 = vmatpush1.bf16.msra.mxu0 %v2720
    %3266 = vmatprep.subr.bf16.mxu0 %v2727
    %3267 = vmatpush1.bf16.msra.mxu0 %v2726
    %3268 = vmatprep.subr.bf16.mxu0 %v2733
    %3269 = vmatpush1.bf16.msra.mxu0 %v2732
    %3270 = vmatprep.subr.bf16.mxu0 %v2739
    %3271 = vmatpush1.bf16.msra.mxu0 %v2738
    %3272 = vmatprep.mubr.bf16.mxu0 %v1837
    %3273 = vmatmul.mubr.bf16.gmra.mrb[0].mxu0 %v1836
    %v3274 = vpop.f32.mrb[0].mxu0
    %v3275 = vadd.f32 %v2057, %v3274
    %v3276 = vpop.f32.mrb[0].mxu0
    %v3277 = vadd.f32 %v2061, %v3276
    %v3278 = vpop.f32.mrb[0].mxu0
    %v3279 = vadd.f32 %v2057, %v3278
    %v3280 = vpop.f32.mrb[0].mxu0
    %v3281 = vadd.f32 %v2061, %v3280
    %3282 = vmatprep.mubr.bf16.mxu0 %v1841
    %3283 = vmatmul.mubr.bf16.gmra.mrb[0].mxu0 %v1840
    %v3284 = vpop.f32.mrb[0].mxu0
    %v3285 = vadd.f32 %v2057, %v3284
    %v3286 = vpop.f32.mrb[0].mxu0
    %v3287 = vadd.f32 %v2061, %v3286
    %v3288 = vpop.f32.mrb[0].mxu0
    %v3289 = vadd.f32 %v2057, %v3288
    %v3290 = vpop.f32.mrb[0].mxu0
    %v3291 = vadd.f32 %v2061, %v3290
    %3292 = vdwg.mxu0
    %3293 = vmatprep.subr.bf16.mxu0 %v2745
    %3294 = vmatpush1.bf16.msra.mxu0 %v2744
    %3295 = vmatprep.subr.bf16.mxu0 %v2751
    %3296 = vmatpush1.bf16.msra.mxu0 %v2750
    %3297 = vmatprep.subr.bf16.mxu0 %v2757
    %3298 = vmatpush1.bf16.msra.mxu0 %v2756
    %3299 = vmatprep.subr.bf16.mxu0 %v2763
    %3300 = vmatpush1.bf16.msra.mxu0 %v2762
    %3301 = vmatprep.subr.bf16.mxu0 %v2769
    %3302 = vmatpush1.bf16.msra.mxu0 %v2768
    %3303 = vmatprep.subr.bf16.mxu0 %v2775
    %3304 = vmatpush1.bf16.msra.mxu0 %v2774
    %3305 = vmatprep.subr.bf16.mxu0 %v2781
    %3306 = vmatpush1.bf16.msra.mxu0 %v2780
    %3307 = vmatprep.subr.bf16.mxu0 %v2787
    %3308 = vmatpush1.bf16.msra.mxu0 %v2786
    %3309 = vmatprep.subr.bf16.mxu0 %v2793
    %3310 = vmatpush1.bf16.msra.mxu0 %v2792
    %3311 = vmatprep.subr.bf16.mxu0 %v2799
    %3312 = vmatpush1.bf16.msra.mxu0 %v2798
    %3313 = vmatprep.subr.bf16.mxu0 %v2805
    %3314 = vmatpush1.bf16.msra.mxu0 %v2804
    %3315 = vmatprep.subr.bf16.mxu0 %v2811
    %3316 = vmatpush1.bf16.msra.mxu0 %v2810
    %3317 = vmatprep.subr.bf16.mxu0 %v2817
    %3318 = vmatpush1.bf16.msra.mxu0 %v2816
    %3319 = vmatprep.subr.bf16.mxu0 %v2823
    %3320 = vmatpush1.bf16.msra.mxu0 %v2822
    %3321 = vmatprep.subr.bf16.mxu0 %v2829
    %3322 = vmatpush1.bf16.msra.mxu0 %v2828
    %3323 = vmatprep.subr.bf16.mxu0 %v2835
    %3324 = vmatpush1.bf16.msra.mxu0 %v2834
    %3325 = vmatprep.mubr.bf16.mxu0 %v1839
    %3326 = vmatmul.mubr.bf16.gmra.mrb[0].mxu0 %v1838
    %v3327 = vpop.f32.mrb[0].mxu0
    %v3328 = vadd.f32 %v3275, %v3327
    %v3329 = vpop.f32.mrb[0].mxu0
    %v3330 = vadd.f32 %v3277, %v3329
    %v3331 = vpop.f32.mrb[0].mxu0
    %v3332 = vadd.f32 %v3279, %v3331
    %v3333 = vpop.f32.mrb[0].mxu0
    %v3334 = vadd.f32 %v3281, %v3333
    %3335 = vmatprep.mubr.bf16.mxu0 %v1843
    %3336 = vmatmul.mubr.bf16.gmra.mrb[0].mxu0 %v1842
    %v3337 = vpop.f32.mrb[0].mxu0
    %v3338 = vadd.f32 %v3285, %v3337
    %v3339 = vpop.f32.mrb[0].mxu0
    %v3340 = vadd.f32 %v3287, %v3339
    %v3341 = vpop.f32.mrb[0].mxu0
    %v3342 = vadd.f32 %v3289, %v3341
    %v3343 = vpop.f32.mrb[0].mxu0
    %v3344 = vadd.f32 %v3291, %v3343
    %3345 = vdwg.mxu0
    %3346 = vst [vmem:[#allocation12] sm:$0xff] %v3116
    %3347 = vst [vmem:[#allocation12 + $0x8] sm:$0xff] %v3118
    %3348 = vst [vmem:[#allocation12 + $0x10] sm:$0xff] %v3222
    %3349 = vst [vmem:[#allocation12 + $0x18] sm:$0xff] %v3224
    %3350 = vst [vmem:[#allocation12 + $0x20] sm:$0xff] %v3328
    %3351 = vst [vmem:[#allocation12 + $0x28] sm:$0xff] %v3330
    %3352 = vst [vmem:[#allocation12 + $0x30] sm:$0xff] %v3120
    %3353 = vst [vmem:[#allocation12 + $0x38] sm:$0xff] %v3122
    %3354 = vst [vmem:[#allocation12 + $0x40] sm:$0xff] %v3226
    %3355 = vst [vmem:[#allocation12 + $0x48] sm:$0xff] %v3228
    %3356 = vst [vmem:[#allocation12 + $0x50] sm:$0xff] %v3332
    %3357 = vst [vmem:[#allocation12 + $0x58] sm:$0xff] %v3334
    %3358 = vst [vmem:[#allocation12 + $0x60] sm:$0xff] %v3126
    %3359 = vst [vmem:[#allocation12 + $0x68] sm:$0xff] %v3128
    %3360 = vst [vmem:[#allocation12 + $0x70] sm:$0xff] %v3232
    %3361 = vst [vmem:[#allocation12 + $0x78] sm:$0xff] %v3234
    %3362 = vst [vmem:[#allocation12 + $0x80] sm:$0xff] %v3338
    %3363 = vst [vmem:[#allocation12 + $0x88] sm:$0xff] %v3340
    %3364 = vst [vmem:[#allocation12 + $0x90] sm:$0xff] %v3130
    %3365 = vst [vmem:[#allocation12 + $0x98] sm:$0xff] %v3132
    %3366 = vst [vmem:[#allocation12 + $0xa0] sm:$0xff] %v3236
    %3367 = vst [vmem:[#allocation12 + $0xa8] sm:$0xff] %v3238
    %3368 = vst [vmem:[#allocation12 + $0xb0] sm:$0xff] %v3342
    %3369 = vst [vmem:[#allocation12 + $0xb8] sm:$0xff] %v3344
    // Predicated region
    $region62: #{tpu_custom_call.1} parent=1 // pred_check
      _
    $region63: #{tpu_custom_call.1} parent=1 // pred_check_branch
      %3371 = sbr.rel (0) target = $region65
    $region64: #{tpu_custom_call.1} parent=1 // pred_region
      %s3373 = ssub.s32 3072, 3072
      %3374 = vsyncadd [#allocation5], %s3373
      %s3375 = sshll.u32 [#allocation12], 4
      %s3376 = int_to_ptr.vmem [resolvable:$true] %s3375
      %3381 = dma.vmem_to_hbm [thread:$0]  %s3376, 3072, %s9, [#allocation5], 768, 768, 48
    $region65: #{tpu_custom_call.1} parent=1 // pred_fallthru
      _
    // Predicated region
    $region66: #{tpu_custom_call.1} parent=1 // pred_check
      _
    $region67: #{tpu_custom_call.1} parent=1 // pred_check_branch
      %3383 = sbr.rel (0) target = $region69
    $region68: #{tpu_custom_call.1} parent=1 // pred_region
      %3384 = dma.done [#allocation5], 3072
    $region69: #{tpu_custom_call.1} parent=1 // pred_fallthru
      _
    %3385 = vsyncpa [#allocation4], 1
    %3386 = vsyncpa [#allocation7], 1
    %3387 = vsyncpa [#allocation10], 1
    %3388 = vsyncpa [#allocation5], 1

</llo_original>
